<compile_context>
chip_gen: v7x
topology: tpu7x:2x2x1
jax: 0.10.0
libtpu: 0.0.40
codegen_flags: <defaults>
</compile_context>

<pallas_src>
import functools
import math

import jax
import jax.numpy as jnp
from jax.experimental import pallas as pl
from jax.experimental.pallas import tpu as pltpu  # noqa: F401  (TPU backend)


def _layer_norm(x, w, b, eps=1e-12):
    # TF-style LayerNorm (eps inside sqrt), biased variance, eps=1e-12 — matches
    # the module's custom LayerNorm (NOT nn.LayerNorm's 1e-5).
    u = jnp.mean(x, axis=-1, keepdims=True)
    s = jnp.mean((x - u) ** 2, axis=-1, keepdims=True)
    return w * ((x - u) / jnp.sqrt(s + eps)) + b


# Row indices inside the packed "vecs" bundle (rows 8..8+T-1 hold pos embeddings).
_LN1_W, _LN1_B, _LN2_W, _LN2_B, _OUT_B, _PJ_B, _QKV_B, _FC_B, _POS0 = range(9)


def video_header_kernel(
    x_ref,        # (B, T, D)   input clip features
    vecs_ref,     # (8+T, 4D)   packed bias/scale vectors + frame position embeddings
    wqkv_ref,     # (D, 3D)     fused [Wq*1/sqrt(dh) | Wk | Wv]
    wo_ref,       # (D, D)      out_proj weight (pre-transposed)
    fcw_ref,      # (D, 4D)     c_fc weight (pre-transposed)
    pjw_ref,      # (4D, D)     c_proj weight (pre-transposed)
    o_ref,        # (B, D)
    *, n_head,
):
    B, T, D = x_ref.shape
    dh = D // n_head
    D3 = 3 * D

    # ---- unpack the small-vector bundle (2 vregs) -----------------------------
    vecs = vecs_ref[...]
    ln1_w = vecs[_LN1_W:_LN1_W + 1, :D]
    ln1_b = vecs[_LN1_B:_LN1_B + 1, :D]
    ln2_w = vecs[_LN2_W:_LN2_W + 1, :D]
    ln2_b = vecs[_LN2_B:_LN2_B + 1, :D]
    out_b = vecs[_OUT_B:_OUT_B + 1, :D]
    pj_b = vecs[_PJ_B:_PJ_B + 1, :D]
    qkv_b = vecs[_QKV_B:_QKV_B + 1, :D3]
    fc_b = vecs[_FC_B:_FC_B + 1, :]
    pos = vecs[_POS0:_POS0 + T, :D]                      # (T, D)

    # ---- frame position embedding add; flatten (B,T) rows, D stays on lanes ---
    x = x_ref[...].astype(jnp.float32) + pos[None, :, :]
    x2d = x.reshape(B * T, D)

    # ---- attention branch: x + out_proj(MHA(ln_1(x))) --------------------------
    xn = _layer_norm(x2d, ln1_w, ln1_b)
    # ONE fused QKV projection (q already scaled by 1/sqrt(dh) on the host).
    qkv = jnp.dot(xn, wqkv_ref[...], preferred_element_type=jnp.float32) + qkv_b
    qkv3 = qkv.reshape(B, T, D3)                         # free leading-dim split

    def split_heads(off):
        # (B,T,dh) lane slices stacked along a NEW leading head axis -> (H*B,T,dh).
        # This is the (B,T,H,dh)->(H,B,T,dh) transpose written as slice+concat,
        # since Mosaic only transposes minor dims.  Batch ordering is (h, b).
        return jnp.concatenate(
            [qkv3[:, :, off + h * dh: off + (h + 1) * dh] for h in range(n_head)],
            axis=0)

    q = split_heads(0)
    k = split_heads(D)
    v = split_heads(2 * D)

    # Head-batched attention: single dot_general per step, batch dim = H*B.
    s = jnp.einsum("bqe,bke->bqk", q, k, preferred_element_type=jnp.float32)
    s = s - jnp.max(s, axis=-1, keepdims=True)
    p = jnp.exp(s)
    p = p * pl.reciprocal(jnp.sum(p, axis=-1, keepdims=True), approx=True)
    a = jnp.einsum("bqk,bke->bqe", p, v, preferred_element_type=jnp.float32)

    # Re-assemble heads along lanes -> (B*T, D), then ONE full-width out_proj dot.
    a5 = a.reshape(n_head, B, T, dh)                     # free leading-dim split
    a_merged = jnp.concatenate([a5[h] for h in range(n_head)], axis=-1)  # (B,T,D)
    attn = jnp.dot(a_merged.reshape(B * T, D), wo_ref[...],
                   preferred_element_type=jnp.float32) + out_b
    x1 = x2d + attn

    # ---- MLP branch with the temporal mean hoisted ahead of c_proj -------------
    xn2 = _layer_norm(x1, ln2_w, ln2_b)
    hdn = jnp.dot(xn2, fcw_ref[...], preferred_element_type=jnp.float32) + fc_b
    hdn = hdn * jax.nn.sigmoid(1.702 * hdn)              # QuickGELU (f32)

    inv_t = 1.0 / T
    x1_mean = jnp.sum(x1.reshape(B, T, D), axis=1) * inv_t          # (B, D)
    hdn_mean = jnp.sum(hdn.reshape(B, T, 4 * D), axis=1) * inv_t    # (B, 4D)
    out = x1_mean + jnp.dot(hdn_mean, pjw_ref[...],
                            preferred_element_type=jnp.float32) + pj_b
    o_ref[...] = out.astype(o_ref.dtype)


def init_params(key, d_model, context_length=16):
    """Synthetic deterministic parameters in the PyTorch layout of the module."""
    ks = jax.random.split(key, 9)
    std = 0.02
    D = d_model
    return {
        "pos_emb": std * jax.random.normal(ks[0], (context_length, D), jnp.float32),
        "in_proj_w": std * jax.random.normal(ks[1], (3 * D, D), jnp.float32),
        "in_proj_b": 0.01 * jax.random.normal(ks[2], (3 * D,), jnp.float32),
        "out_proj_w": std * jax.random.normal(ks[3], (D, D), jnp.float32),
        "out_proj_b": 0.01 * jax.random.normal(ks[4], (D,), jnp.float32),
        "ln1_w": jnp.ones((D,), jnp.float32),
        "ln1_b": jnp.zeros((D,), jnp.float32),
        "ln2_w": jnp.ones((D,), jnp.float32),
        "ln2_b": jnp.zeros((D,), jnp.float32),
        "fc_w": std * jax.random.normal(ks[5], (4 * D, D), jnp.float32),
        "fc_b": 0.01 * jax.random.normal(ks[6], (4 * D,), jnp.float32),
        "proj_w": std * jax.random.normal(ks[7], (D, 4 * D), jnp.float32),
        "proj_b": 0.01 * jax.random.normal(ks[8], (D,), jnp.float32),
    }


def prepare_params(raw, n_head, t):
    """One-time HOST re-layout: 18 PyTorch tensors -> 5 kernel operands.

    All parameters stay float32 (right choice at D=32; bf16 weights only pay at
    production d_model where HBM bytes matter — valid on v5e/v6e/v7x alike).
    """
    D = raw["ln1_w"].shape[0]
    dh = D // n_head
    D4 = 4 * D
    scale = 1.0 / math.sqrt(dh)

    # PyTorch Linear: y = x @ W.T + b with W:(D_out, D_in).
    in_w, in_b = raw["in_proj_w"], raw["in_proj_b"]
    w_qkv = jnp.concatenate(
        [in_w[:D].T * scale, in_w[D:2 * D].T, in_w[2 * D:].T], axis=1)  # (D, 3D)
    b_qkv = jnp.concatenate([in_b[:D] * scale, in_b[D:]])               # (3D,)

    def row(v):
        v = v.astype(jnp.float32)
        return jnp.pad(v, (0, D4 - v.shape[0]))

    vec_rows = jnp.stack([
        row(raw["ln1_w"]), row(raw["ln1_b"]),
        row(raw["ln2_w"]), row(raw["ln2_b"]),
        row(raw["out_proj_b"]), row(raw["proj_b"]),
        row(b_qkv), row(raw["fc_b"]),
    ])                                                                   # (8, 4D)
    pos_rows = jnp.pad(raw["pos_emb"][:t].astype(jnp.float32),
                       ((0, 0), (0, D4 - D)))                            # (T, 4D)
    vecs = jnp.concatenate([vec_rows, pos_rows], axis=0)                 # (8+T, 4D)

    return dict(
        vecs=vecs,
        w_qkv=w_qkv.astype(jnp.float32),
        wo=raw["out_proj_w"].T.astype(jnp.float32),      # (D, D)
        fc_w=raw["fc_w"].T.astype(jnp.float32),          # (D, 4D)
        pj_w=raw["proj_w"].T.astype(jnp.float32),        # (4D, D)
    )


def video_header_forward(x_btc, prep, n_head):
    """Full video_header ('Transf') forward: x (B, T, C) -> (B, C)."""
    B, T, D = x_btc.shape
    # No grid: one invocation; every operand is a whole-array VMEM block.
    return pl.pallas_call(
        functools.partial(video_header_kernel, n_head=n_head),
        out_shape=jax.ShapeDtypeStruct((B, D), x_btc.dtype),
    )(x_btc, prep["vecs"], prep["w_qkv"], prep["wo"], prep["fc_w"], prep["pj_w"])


def reference_forward(x_btc, raw, n_head):
    """Pure-JAX reference matching the PyTorch module math."""
    B, T, D = x_btc.shape
    dh = D // n_head
    x = x_btc + raw["pos_emb"][:T][None]

    def ln(t, w, b):
        u = jnp.mean(t, -1, keepdims=True)
        s = jnp.mean((t - u) ** 2, -1, keepdims=True)
        return w * ((t - u) / jnp.sqrt(s + 1e-12)) + b

    xn = ln(x, raw["ln1_w"], raw["ln1_b"])
    qkv = jnp.einsum("btd,ed->bte", xn, raw["in_proj_w"]) + raw["in_proj_b"]
    q, k, v = qkv[..., :D], qkv[..., D:2 * D], qkv[..., 2 * D:]
    q = q.reshape(B, T, n_head, dh) / math.sqrt(dh)
    k = k.reshape(B, T, n_head, dh)
    v = v.reshape(B, T, n_head, dh)
    s = jnp.einsum("bqhe,bkhe->bhqk", q, k)
    p = jax.nn.softmax(s, axis=-1)
    a = jnp.einsum("bhqk,bkhe->bqhe", p, v).reshape(B, T, D)
    a = jnp.einsum("btd,ed->bte", a, raw["out_proj_w"]) + raw["out_proj_b"]
    x1 = x + a
    xn2 = ln(x1, raw["ln2_w"], raw["ln2_b"])
    h = jnp.einsum("btd,ed->bte", xn2, raw["fc_w"]) + raw["fc_b"]
    h = h * jax.nn.sigmoid(1.702 * h)
    m = jnp.einsum("bte,de->btd", h, raw["proj_w"]) + raw["proj_b"]
    y = x1 + m
    return jnp.mean(y, axis=1)


if __name__ == "__main__":
    B, T, D, H = 2, 8, 32, 4  # video clips, frames per clip, embed dim, heads
    key = jax.random.PRNGKey(0)
    kx, kp = jax.random.split(key)
    x = jax.random.normal(kx, (B, T, D), jnp.float32)

    raw = init_params(kp, D, context_length=16)
    prep = prepare_params(raw, H, T)           # one-time host re-layout / packing

    out = jax.block_until_ready(video_header_forward(x, prep, H))
    ref = jax.block_until_ready(reference_forward(x, raw, H))

    assert out.shape == (B, D)
    assert jnp.allclose(out, ref, atol=2e-2, rtol=2e-2), float(jnp.max(jnp.abs(out - ref)))
    print("KERNEL_OK")
</pallas_src>

<mosaic_0001>
module attributes {stable_mosaic.version = 11 : i64} {
  func.func @video_header_kernel(%arg0: memref<2x8x32xf32, #tpu.memory_space<vmem>>, %arg1: memref<16x128xf32, #tpu.memory_space<vmem>>, %arg2: memref<32x96xf32, #tpu.memory_space<vmem>>, %arg3: memref<32x32xf32, #tpu.memory_space<vmem>>, %arg4: memref<32x128xf32, #tpu.memory_space<vmem>>, %arg5: memref<128x32xf32, #tpu.memory_space<vmem>>, %arg6: memref<2x32xf32, #tpu.memory_space<vmem>>) attributes {dimension_semantics = [], scalar_prefetch = 0 : i64, scratch_operands = 0 : i64, tpu.core_type = #tpu.core_type<tc>} {
    %c0 = arith.constant 0 : index
    %c0_0 = arith.constant 0 : index
    %0 = vector.load %arg1[%c0, %c0_0] : memref<16x128xf32, #tpu.memory_space<vmem>>, vector<16x128xf32>
    %1 = vector.extract_strided_slice %0 {offsets = [0, 0], sizes = [1, 32], strides = [1, 1]} : vector<16x128xf32> to vector<1x32xf32>
    %2 = vector.extract_strided_slice %0 {offsets = [1, 0], sizes = [1, 32], strides = [1, 1]} : vector<16x128xf32> to vector<1x32xf32>
    %3 = vector.extract_strided_slice %0 {offsets = [2, 0], sizes = [1, 32], strides = [1, 1]} : vector<16x128xf32> to vector<1x32xf32>
    %4 = vector.extract_strided_slice %0 {offsets = [3, 0], sizes = [1, 32], strides = [1, 1]} : vector<16x128xf32> to vector<1x32xf32>
    %5 = vector.extract_strided_slice %0 {offsets = [4, 0], sizes = [1, 32], strides = [1, 1]} : vector<16x128xf32> to vector<1x32xf32>
    %6 = vector.extract_strided_slice %0 {offsets = [5, 0], sizes = [1, 32], strides = [1, 1]} : vector<16x128xf32> to vector<1x32xf32>
    %7 = vector.extract_strided_slice %0 {offsets = [6, 0], sizes = [1, 96], strides = [1, 1]} : vector<16x128xf32> to vector<1x96xf32>
    %8 = vector.extract_strided_slice %0 {offsets = [7, 0], sizes = [1, 128], strides = [1, 1]} : vector<16x128xf32> to vector<1x128xf32>
    %9 = vector.extract_strided_slice %0 {offsets = [8, 0], sizes = [8, 32], strides = [1, 1]} : vector<16x128xf32> to vector<8x32xf32>
    %c0_1 = arith.constant 0 : index
    %c0_2 = arith.constant 0 : index
    %c0_3 = arith.constant 0 : index
    %10 = vector.load %arg0[%c0_1, %c0_2, %c0_3] : memref<2x8x32xf32, #tpu.memory_space<vmem>>, vector<2x8x32xf32>
    %11 = vector.shape_cast %9 : vector<8x32xf32> to vector<1x8x32xf32>
    %12 = vector.broadcast %11 : vector<1x8x32xf32> to vector<2x8x32xf32>
    %13 = arith.addf %10, %12 : vector<2x8x32xf32>
    %14 = vector.shape_cast %13 : vector<2x8x32xf32> to vector<16x32xf32>
    %cst = arith.constant dense<0.000000e+00> : vector<16xf32>
    %15 = vector.multi_reduction <add>, %14, %cst [1] : vector<16x32xf32> to vector<16xf32>
    %16 = vector.shape_cast %15 : vector<16xf32> to vector<16x1xf32>
    %cst_4 = arith.constant 3.200000e+01 : f32
    %17 = vector.broadcast %cst_4 : f32 to vector<16x1xf32>
    %18 = arith.divf %16, %17 : vector<16x1xf32>
    %19 = vector.broadcast %18 : vector<16x1xf32> to vector<16x32xf32>
    %20 = arith.subf %14, %19 : vector<16x32xf32>
    %21 = arith.mulf %20, %20 : vector<16x32xf32>
    %cst_5 = arith.constant dense<0.000000e+00> : vector<16xf32>
    %22 = vector.multi_reduction <add>, %21, %cst_5 [1] : vector<16x32xf32> to vector<16xf32>
    %23 = vector.shape_cast %22 : vector<16xf32> to vector<16x1xf32>
    %cst_6 = arith.constant 3.200000e+01 : f32
    %24 = vector.broadcast %cst_6 : f32 to vector<16x1xf32>
    %25 = arith.divf %23, %24 : vector<16x1xf32>
    %26 = vector.broadcast %18 : vector<16x1xf32> to vector<16x32xf32>
    %27 = arith.subf %14, %26 : vector<16x32xf32>
    %cst_7 = arith.constant 9.99999996E-13 : f32
    %28 = vector.broadcast %cst_7 : f32 to vector<16x1xf32>
    %29 = arith.addf %25, %28 : vector<16x1xf32>
    %30 = math.sqrt %29 : vector<16x1xf32>
    %31 = vector.broadcast %30 : vector<16x1xf32> to vector<16x32xf32>
    %32 = arith.divf %27, %31 : vector<16x32xf32>
    %33 = vector.broadcast %1 : vector<1x32xf32> to vector<16x32xf32>
    %34 = arith.mulf %33, %32 : vector<16x32xf32>
    %35 = vector.broadcast %2 : vector<1x32xf32> to vector<16x32xf32>
    %36 = arith.addf %34, %35 : vector<16x32xf32>
    %c0_8 = arith.constant 0 : index
    %c0_9 = arith.constant 0 : index
    %37 = vector.load %arg2[%c0_8, %c0_9] : memref<32x96xf32, #tpu.memory_space<vmem>>, vector<32x96xf32>
    %cst_10 = arith.constant dense<0.000000e+00> : vector<16x96xf32>
    %38 = tpu.matmul %36, %37, %cst_10 {dimension_numbers = #tpu.dot_dimension_numbers<[1], [0], [0], [1], [0, 0, 1, 1], [], []>} : vector<16x32xf32>, vector<32x96xf32>, vector<16x96xf32> -> vector<16x96xf32>
    %39 = vector.broadcast %7 : vector<1x96xf32> to vector<16x96xf32>
    %40 = arith.addf %38, %39 : vector<16x96xf32>
    %41 = vector.shape_cast %40 : vector<16x96xf32> to vector<2x8x96xf32>
    %42 = vector.extract_strided_slice %41 {offsets = [0, 0, 0], sizes = [2, 8, 8], strides = [1, 1, 1]} : vector<2x8x96xf32> to vector<2x8x8xf32>
    %43 = vector.extract_strided_slice %41 {offsets = [0, 0, 8], sizes = [2, 8, 8], strides = [1, 1, 1]} : vector<2x8x96xf32> to vector<2x8x8xf32>
    %44 = vector.extract_strided_slice %41 {offsets = [0, 0, 16], sizes = [2, 8, 8], strides = [1, 1, 1]} : vector<2x8x96xf32> to vector<2x8x8xf32>
    %45 = vector.extract_strided_slice %41 {offsets = [0, 0, 24], sizes = [2, 8, 8], strides = [1, 1, 1]} : vector<2x8x96xf32> to vector<2x8x8xf32>
    %46 = tpu.concatenate %42, %43, %44, %45 in 0 : vector<2x8x8xf32>, vector<2x8x8xf32>, vector<2x8x8xf32>, vector<2x8x8xf32> -> vector<8x8x8xf32>
    %47 = vector.extract_strided_slice %41 {offsets = [0, 0, 32], sizes = [2, 8, 8], strides = [1, 1, 1]} : vector<2x8x96xf32> to vector<2x8x8xf32>
    %48 = vector.extract_strided_slice %41 {offsets = [0, 0, 40], sizes = [2, 8, 8], strides = [1, 1, 1]} : vector<2x8x96xf32> to vector<2x8x8xf32>
    %49 = vector.extract_strided_slice %41 {offsets = [0, 0, 48], sizes = [2, 8, 8], strides = [1, 1, 1]} : vector<2x8x96xf32> to vector<2x8x8xf32>
    %50 = vector.extract_strided_slice %41 {offsets = [0, 0, 56], sizes = [2, 8, 8], strides = [1, 1, 1]} : vector<2x8x96xf32> to vector<2x8x8xf32>
    %51 = tpu.concatenate %47, %48, %49, %50 in 0 : vector<2x8x8xf32>, vector<2x8x8xf32>, vector<2x8x8xf32>, vector<2x8x8xf32> -> vector<8x8x8xf32>
    %52 = vector.extract_strided_slice %41 {offsets = [0, 0, 64], sizes = [2, 8, 8], strides = [1, 1, 1]} : vector<2x8x96xf32> to vector<2x8x8xf32>
    %53 = vector.extract_strided_slice %41 {offsets = [0, 0, 72], sizes = [2, 8, 8], strides = [1, 1, 1]} : vector<2x8x96xf32> to vector<2x8x8xf32>
    %54 = vector.extract_strided_slice %41 {offsets = [0, 0, 80], sizes = [2, 8, 8], strides = [1, 1, 1]} : vector<2x8x96xf32> to vector<2x8x8xf32>
    %55 = vector.extract_strided_slice %41 {offsets = [0, 0, 88], sizes = [2, 8, 8], strides = [1, 1, 1]} : vector<2x8x96xf32> to vector<2x8x8xf32>
    %56 = tpu.concatenate %52, %53, %54, %55 in 0 : vector<2x8x8xf32>, vector<2x8x8xf32>, vector<2x8x8xf32>, vector<2x8x8xf32> -> vector<8x8x8xf32>
    "tpu.trace_start"() <{level = 10 : i32, message = "bqe,bke->bqk"}> : () -> ()
    %cst_11 = arith.constant dense<0.000000e+00> : vector<8x8x8xf32>
    %57 = tpu.matmul %46, %51, %cst_11 {dimension_numbers = #tpu.dot_dimension_numbers<[2], [2], [1], [1], [0, 0, 0, 1, 1, 1], [0], [0]>} : vector<8x8x8xf32>, vector<8x8x8xf32>, vector<8x8x8xf32> -> vector<8x8x8xf32>
    "tpu.trace_stop"() : () -> ()
    %cst_12 = arith.constant dense<0xFF800000> : vector<8x8xf32>
    %58 = vector.multi_reduction <maximumf>, %57, %cst_12 [2] : vector<8x8x8xf32> to vector<8x8xf32>
    %59 = vector.shape_cast %58 : vector<8x8xf32> to vector<8x8x1xf32>
    %60 = vector.broadcast %59 : vector<8x8x1xf32> to vector<8x8x8xf32>
    %61 = arith.subf %57, %60 : vector<8x8x8xf32>
    %62 = math.exp %61 : vector<8x8x8xf32>
    %cst_13 = arith.constant dense<0.000000e+00> : vector<8x8xf32>
    %63 = vector.multi_reduction <add>, %62, %cst_13 [2] : vector<8x8x8xf32> to vector<8x8xf32>
    %64 = vector.shape_cast %63 : vector<8x8xf32> to vector<8x8x1xf32>
    %65 = tpu.reciprocal %64 {approx = true} : vector<8x8x1xf32> -> vector<8x8x1xf32>
    %66 = vector.broadcast %65 : vector<8x8x1xf32> to vector<8x8x8xf32>
    %67 = arith.mulf %62, %66 : vector<8x8x8xf32>
    "tpu.trace_start"() <{level = 10 : i32, message = "bqk,bke->bqe"}> : () -> ()
    %cst_14 = arith.constant dense<0.000000e+00> : vector<8x8x8xf32>
    %68 = tpu.matmul %67, %56, %cst_14 {dimension_numbers = #tpu.dot_dimension_numbers<[2], [1], [1], [2], [0, 0, 0, 1, 1, 2], [0], [0]>} : vector<8x8x8xf32>, vector<8x8x8xf32>, vector<8x8x8xf32> -> vector<8x8x8xf32>
    "tpu.trace_stop"() : () -> ()
    %69 = vector.shape_cast %68 : vector<8x8x8xf32> to vector<4x2x8x8xf32>
    %70 = vector.extract_strided_slice %69 {offsets = [0, 0, 0, 0], sizes = [1, 2, 8, 8], strides = [1, 1, 1, 1]} : vector<4x2x8x8xf32> to vector<1x2x8x8xf32>
    %71 = vector.shape_cast %70 : vector<1x2x8x8xf32> to vector<2x8x8xf32>
    %72 = vector.extract_strided_slice %69 {offsets = [1, 0, 0, 0], sizes = [1, 2, 8, 8], strides = [1, 1, 1, 1]} : vector<4x2x8x8xf32> to vector<1x2x8x8xf32>
    %73 = vector.shape_cast %72 : vector<1x2x8x8xf32> to vector<2x8x8xf32>
    %74 = vector.extract_strided_slice %69 {offsets = [2, 0, 0, 0], sizes = [1, 2, 8, 8], strides = [1, 1, 1, 1]} : vector<4x2x8x8xf32> to vector<1x2x8x8xf32>
    %75 = vector.shape_cast %74 : vector<1x2x8x8xf32> to vector<2x8x8xf32>
    %76 = vector.extract_strided_slice %69 {offsets = [3, 0, 0, 0], sizes = [1, 2, 8, 8], strides = [1, 1, 1, 1]} : vector<4x2x8x8xf32> to vector<1x2x8x8xf32>
    %77 = vector.shape_cast %76 : vector<1x2x8x8xf32> to vector<2x8x8xf32>
    %78 = tpu.concatenate %71, %73, %75, %77 in 2 : vector<2x8x8xf32>, vector<2x8x8xf32>, vector<2x8x8xf32>, vector<2x8x8xf32> -> vector<2x8x32xf32>
    %79 = vector.shape_cast %78 : vector<2x8x32xf32> to vector<16x32xf32>
    %c0_15 = arith.constant 0 : index
    %c0_16 = arith.constant 0 : index
    %80 = vector.load %arg3[%c0_15, %c0_16] : memref<32x32xf32, #tpu.memory_space<vmem>>, vector<32x32xf32>
    %cst_17 = arith.constant dense<0.000000e+00> : vector<16x32xf32>
    %81 = tpu.matmul %79, %80, %cst_17 {dimension_numbers = #tpu.dot_dimension_numbers<[1], [0], [0], [1], [0, 0, 1, 1], [], []>} : vector<16x32xf32>, vector<32x32xf32>, vector<16x32xf32> -> vector<16x32xf32>
    %82 = vector.broadcast %5 : vector<1x32xf32> to vector<16x32xf32>
    %83 = arith.addf %81, %82 : vector<16x32xf32>
    %84 = arith.addf %14, %83 : vector<16x32xf32>
    %cst_18 = arith.constant dense<0.000000e+00> : vector<16xf32>
    %85 = vector.multi_reduction <add>, %84, %cst_18 [1] : vector<16x32xf32> to vector<16xf32>
    %86 = vector.shape_cast %85 : vector<16xf32> to vector<16x1xf32>
    %cst_19 = arith.constant 3.200000e+01 : f32
    %87 = vector.broadcast %cst_19 : f32 to vector<16x1xf32>
    %88 = arith.divf %86, %87 : vector<16x1xf32>
    %89 = vector.broadcast %88 : vector<16x1xf32> to vector<16x32xf32>
    %90 = arith.subf %84, %89 : vector<16x32xf32>
    %91 = arith.mulf %90, %90 : vector<16x32xf32>
    %cst_20 = arith.constant dense<0.000000e+00> : vector<16xf32>
    %92 = vector.multi_reduction <add>, %91, %cst_20 [1] : vector<16x32xf32> to vector<16xf32>
    %93 = vector.shape_cast %92 : vector<16xf32> to vector<16x1xf32>
    %cst_21 = arith.constant 3.200000e+01 : f32
    %94 = vector.broadcast %cst_21 : f32 to vector<16x1xf32>
    %95 = arith.divf %93, %94 : vector<16x1xf32>
    %96 = vector.broadcast %88 : vector<16x1xf32> to vector<16x32xf32>
    %97 = arith.subf %84, %96 : vector<16x32xf32>
    %cst_22 = arith.constant 9.99999996E-13 : f32
    %98 = vector.broadcast %cst_22 : f32 to vector<16x1xf32>
    %99 = arith.addf %95, %98 : vector<16x1xf32>
    %100 = math.sqrt %99 : vector<16x1xf32>
    %101 = vector.broadcast %100 : vector<16x1xf32> to vector<16x32xf32>
    %102 = arith.divf %97, %101 : vector<16x32xf32>
    %103 = vector.broadcast %3 : vector<1x32xf32> to vector<16x32xf32>
    %104 = arith.mulf %103, %102 : vector<16x32xf32>
    %105 = vector.broadcast %4 : vector<1x32xf32> to vector<16x32xf32>
    %106 = arith.addf %104, %105 : vector<16x32xf32>
    %c0_23 = arith.constant 0 : index
    %c0_24 = arith.constant 0 : index
    %107 = vector.load %arg4[%c0_23, %c0_24] : memref<32x128xf32, #tpu.memory_space<vmem>>, vector<32x128xf32>
    %cst_25 = arith.constant dense<0.000000e+00> : vector<16x128xf32>
    %108 = tpu.matmul %106, %107, %cst_25 {dimension_numbers = #tpu.dot_dimension_numbers<[1], [0], [0], [1], [0, 0, 1, 1], [], []>} : vector<16x32xf32>, vector<32x128xf32>, vector<16x128xf32> -> vector<16x128xf32>
    %109 = vector.broadcast %8 : vector<1x128xf32> to vector<16x128xf32>
    %110 = arith.addf %108, %109 : vector<16x128xf32>
    %cst_26 = arith.constant 1.702000e+00 : f32
    %111 = vector.broadcast %cst_26 : f32 to vector<16x128xf32>
    %112 = arith.mulf %111, %110 : vector<16x128xf32>
    %113 = arith.negf %112 : vector<16x128xf32>
    %114 = math.exp %113 : vector<16x128xf32>
    %cst_27 = arith.constant 1.000000e+00 : f32
    %115 = vector.broadcast %cst_27 : f32 to vector<16x128xf32>
    %116 = arith.addf %115, %114 : vector<16x128xf32>
    %117 = arith.divf %115, %116 : vector<16x128xf32>
    %118 = arith.mulf %110, %117 : vector<16x128xf32>
    %119 = vector.shape_cast %84 : vector<16x32xf32> to vector<2x8x32xf32>
    %cst_28 = arith.constant dense<0.000000e+00> : vector<2x32xf32>
    %120 = vector.multi_reduction <add>, %119, %cst_28 [1] : vector<2x8x32xf32> to vector<2x32xf32>
    %cst_29 = arith.constant 1.250000e-01 : f32
    %121 = vector.broadcast %cst_29 : f32 to vector<2x32xf32>
    %122 = arith.mulf %120, %121 : vector<2x32xf32>
    %123 = vector.shape_cast %118 : vector<16x128xf32> to vector<2x8x128xf32>
    %cst_30 = arith.constant dense<0.000000e+00> : vector<2x128xf32>
    %124 = vector.multi_reduction <add>, %123, %cst_30 [1] : vector<2x8x128xf32> to vector<2x128xf32>
    %cst_31 = arith.constant 1.250000e-01 : f32
    %125 = vector.broadcast %cst_31 : f32 to vector<2x128xf32>
    %126 = arith.mulf %124, %125 : vector<2x128xf32>
    %c0_32 = arith.constant 0 : index
    %c0_33 = arith.constant 0 : index
    %127 = vector.load %arg5[%c0_32, %c0_33] : memref<128x32xf32, #tpu.memory_space<vmem>>, vector<128x32xf32>
    %cst_34 = arith.constant dense<0.000000e+00> : vector<2x32xf32>
    %128 = tpu.matmul %126, %127, %cst_34 {dimension_numbers = #tpu.dot_dimension_numbers<[1], [0], [0], [1], [0, 0, 1, 1], [], []>} : vector<2x128xf32>, vector<128x32xf32>, vector<2x32xf32> -> vector<2x32xf32>
    %129 = arith.addf %122, %128 : vector<2x32xf32>
    %130 = vector.broadcast %6 : vector<1x32xf32> to vector<2x32xf32>
    %131 = arith.addf %129, %130 : vector<2x32xf32>
    %c0_35 = arith.constant 0 : index
    %c0_36 = arith.constant 0 : index
    %132 = vector.load %arg6[%c0_35, %c0_36] : memref<2x32xf32, #tpu.memory_space<vmem>>, vector<2x32xf32>
    tpu.vector_store %arg6[%c0_35, %c0_36], %131 {strides = array<i32>} : memref<2x32xf32, #tpu.memory_space<vmem>>, vector<2x32xf32>,
    return
  }
}

</mosaic_0001>

<llo_original>
// kernel: tpu_custom_call.1
$region0: #{tpu_custom_call.1}
  #allocation0 [shape = 'u32[]', space=smem, size = 0x4, offset = 0x4, fixed_abs, tag = 'smem constant byte address 0x4 - core index']
  #allocation1 [shape = 'u32[144,128]{1,0:T(1,128)}', space=vmem, size = 0x12000, scoped, tag = 'internal scratch']
  %s0 = inlined_call_operand.vmem [shape: f32[2,8,32], index: 0, kind: input, shape index: {}]
  %s1 = inlined_call_operand.vmem [shape: f32[16,128], index: 1, kind: input, shape index: {}]
  %s2 = inlined_call_operand.vmem [shape: f32[32,96], index: 2, kind: input, shape index: {}]
  %s3 = inlined_call_operand.vmem [shape: f32[32,32], index: 3, kind: input, shape index: {}]
  %s4 = inlined_call_operand.vmem [shape: f32[32,128], index: 4, kind: input, shape index: {}]
  %s5 = inlined_call_operand.vmem [shape: f32[128,32], index: 5, kind: input, shape index: {}]
  %s6 = inlined_call_operand.hbm [shape: f32[2,32], index: 6, kind: output, shape index: {}]
  %s7 = sld [smem:[#allocation0]]
  $region34: #{tpu_custom_call.1} parent=0
    _
  %s9 = ssub.s32 1, %s7
  %s10 = scalar_select 0, %s9, %s7
  $region1: #{tpu_custom_call.1} parent=0
    #allocation2 [shape = 'u8[1024]{0}', space=vmem, size = 0x400, scoped, tag = 'output window, operand 0, single buffered']
    #allocation3 [shape = 's32[1]{0}', space=sflag, size = 0x4, scoped, tag = 'scoped memory for tpu_custom_call.1']
    %11 = vsyncpa [#allocation3], 0
    // Predicated region
    $region2: #{tpu_custom_call.1} parent=1 // pred_check
      _
    $region3: #{tpu_custom_call.1} parent=1 // pred_check_branch
      %13 = sbr.rel (0) target = $region5
    $region4: #{tpu_custom_call.1} parent=1 // pred_region
      _
    $region5: #{tpu_custom_call.1} parent=1 // pred_fallthru
      _
    // Predicated region
    $region6: #{tpu_custom_call.1} parent=1 // pred_check
      _
    $region7: #{tpu_custom_call.1} parent=1 // pred_check_branch
      %15 = sbr.rel (0) target = $region9
    $region8: #{tpu_custom_call.1} parent=1 // pred_region
      _
    $region9: #{tpu_custom_call.1} parent=1 // pred_fallthru
      _
    // Predicated region
    $region10: #{tpu_custom_call.1} parent=1 // pred_check
      _
    $region11: #{tpu_custom_call.1} parent=1 // pred_check_branch
      %17 = sbr.rel (0) target = $region13
    $region12: #{tpu_custom_call.1} parent=1 // pred_region
      _
    $region13: #{tpu_custom_call.1} parent=1 // pred_fallthru
      _
    // Predicated region
    $region14: #{tpu_custom_call.1} parent=1 // pred_check
      _
    $region15: #{tpu_custom_call.1} parent=1 // pred_check_branch
      %19 = sbr.rel (0) target = $region17
    $region16: #{tpu_custom_call.1} parent=1 // pred_region
      _
    $region17: #{tpu_custom_call.1} parent=1 // pred_fallthru
      _
    // Predicated region
    $region18: #{tpu_custom_call.1} parent=1 // pred_check
      _
    $region19: #{tpu_custom_call.1} parent=1 // pred_check_branch
      %21 = sbr.rel (0) target = $region21
    $region20: #{tpu_custom_call.1} parent=1 // pred_region
      _
    $region21: #{tpu_custom_call.1} parent=1 // pred_fallthru
      _
    // Predicated region
    $region22: #{tpu_custom_call.1} parent=1 // pred_check
      _
    $region23: #{tpu_custom_call.1} parent=1 // pred_check_branch
      %23 = sbr.rel (0) target = $region25
    $region24: #{tpu_custom_call.1} parent=1 // pred_region
      _
    $region25: #{tpu_custom_call.1} parent=1 // pred_fallthru
      _
    %v24 = vld [vmem:[%s1] sm:$0xff]
    %v25 = vld [vmem:[%s1 + $0x8] sm:$0xff]
    %v26 = vld [vmem:[%s0] sm:$0xff]
    %v27 = vld [vmem:[%s0 + $0x8] sm:$0xff]
    %v28 = vadd.f32 %v26, %v25
    %v29 = vadd.f32 %v27, %v25
    %vm30 = vcmask 261120
    %v31 = vsel %vm30, %v28, 0.0
    %32 = vadd.xlane.f32.xlu0 %v31
    %v33 = vpop.xlane.xlu0 %32
    %v34 = vsel %vm30, %v29, 0.0
    %35 = vadd.xlane.f32.xlu0 %v34
    %v36 = vpop.xlane.xlu0 %35
    %v37 = vrcp.pop 32.0
    %v38 = vmul.f32 %v33, %v37
    %v39 = vmul.f32 %v36, %v37
    %v40 = vsub.f32 %v28, %v38
    %v41 = vsub.f32 %v29, %v39
    %v42 = vmul.f32 %v40, %v40
    %v43 = vmul.f32 %v41, %v41
    %v44 = vsel %vm30, %v42, 0.0
    %45 = vadd.xlane.f32.xlu0 %v44
    %v46 = vpop.xlane.xlu0 %45
    %v47 = vsel %vm30, %v43, 0.0
    %48 = vadd.xlane.f32.xlu0 %v47
    %v49 = vpop.xlane.xlu0 %48
    %v50 = vmul.f32 %v46, %v37
    %v51 = vmul.f32 %v49, %v37
    %v52 = vadd.f32 %v50, 1e-12
    %v53 = vadd.f32 %v51, 1e-12
    %v54 = vrsqrt.pop %v52
    %v55 = vmul.f32 %v52, %v54
    %vm56 = vcmp.eq.f32.partialorder %v52, inf
    %v57 = vsel %vm56, %v52, %v55
    %vm58 = vcmp.eq.f32.partialorder %v52, 0.0
    %v59 = vand.u32 %v52, 2147483648
    %v60 = vsel %vm58, %v59, %v57
    %v61 = vrsqrt.pop %v53
    %v62 = vmul.f32 %v53, %v61
    %vm63 = vcmp.eq.f32.partialorder %v53, inf
    %v64 = vsel %vm63, %v53, %v62
    %vm65 = vcmp.eq.f32.partialorder %v53, 0.0
    %v66 = vand.u32 %v53, 2147483648
    %v67 = vsel %vm65, %v66, %v64
    %v68 = vrcp.pop %v60
    %v69 = vmul.f32 %v40, %v68
    %v70 = vrcp.pop %v67
    %v71 = vmul.f32 %v41, %v70
    %v72 = vlaneseq
    %v73 = vshrl.u32 %v72, 7
    %v74 = vsub.s32 0, %v73
    %v75 = vrot.slane %v24, %v74
    %v76 = vmul.f32 %v75, %v69
    %v77 = vmul.f32 %v75, %v71
    %v78 = vlaneseq
    %v79 = vshrl.u32 %v78, 7
    %v80 = vsub.s32 1, %v79
    %v81 = vrot.slane %v24, %v80
    %v82 = vadd.f32 %v76, %v81
    %v83 = vadd.f32 %v77, %v81
    %v84 = vld [vmem:[%s2] sm:$0xff]
    %v85 = vld [vmem:[%s2 + $0x8] sm:$0xff]
    %v86 = vld [vmem:[%s2 + $0x10] sm:$0xff]
    %v87 = vld [vmem:[%s2 + $0x18] sm:$0xff]
    %v88 = vlaneseq
    %v89 = vshrl.u32 %v88, 7
    %v90 = vsub.s32 6, %v89
    %v91 = vrot.slane %v24, %v90
    %v93 = vsel %vm30, %v82, 0
    %v96 = vsel %vm30, %v83, 0
    %98 = vmatprep.subr.mxu0 0.0
    %99 = vmatpush1.msra.mxu0 %v84
    %100 = vmatprep.subr.mxu0 0.0
    %101 = vmatpush1.msra.mxu0 %v85
    %102 = vmatprep.subr.mxu0 0.0
    %103 = vmatpush1.msra.mxu0 %v86
    %104 = vmatprep.subr.mxu0 0.0
    %105 = vmatpush1.msra.mxu0 %v87
    %106 = vmatprep.subr.mxu0 0.0
    %107 = vmatpush1.msra.mxu0 0.0
    %108 = vmatprep.subr.mxu0 0.0
    %109 = vmatpush1.msra.mxu0 0.0
    %110 = vmatprep.subr.mxu0 0.0
    %111 = vmatpush1.msra.mxu0 0.0
    %112 = vmatprep.subr.mxu0 0.0
    %113 = vmatpush1.msra.mxu0 0.0
    %114 = vmatprep.subr.mxu0 0.0
    %115 = vmatpush1.msra.mxu0 0.0
    %116 = vmatprep.subr.mxu0 0.0
    %117 = vmatpush1.msra.mxu0 0.0
    %118 = vmatprep.subr.mxu0 0.0
    %119 = vmatpush1.msra.mxu0 0.0
    %120 = vmatprep.subr.mxu0 0.0
    %121 = vmatpush1.msra.mxu0 0.0
    %122 = vmatprep.subr.mxu0 0.0
    %123 = vmatpush1.msra.mxu0 0.0
    %124 = vmatprep.subr.mxu0 0.0
    %125 = vmatpush1.msra.mxu0 0.0
    %126 = vmatprep.subr.mxu0 0.0
    %127 = vmatpush1.msra.mxu0 0.0
    %128 = vmatprep.subr.mxu0 0.0
    %129 = vmatpush1.msra.mxu0 0.0
    %130 = vmatprep.subr.mxu0 0.0
    %131 = vmatpush1.msra.mxu0 0.0
    %132 = vmatprep.subr.mxu0 0.0
    %133 = vmatpush1.msra.mxu0 0.0
    %134 = vmatprep.subr.mxu0 0.0
    %135 = vmatpush1.msra.mxu0 0.0
    %136 = vmatprep.subr.mxu0 0.0
    %137 = vmatpush1.msra.mxu0 0.0
    %138 = vmatprep.subr.mxu0 0.0
    %139 = vmatpush1.msra.mxu0 0.0
    %140 = vmatprep.subr.mxu0 0.0
    %141 = vmatpush1.msra.mxu0 0.0
    %142 = vmatprep.subr.mxu0 0.0
    %143 = vmatpush1.msra.mxu0 0.0
    %144 = vmatprep.subr.mxu0 0.0
    %145 = vmatpush1.msra.mxu0 0.0
    %146 = vmatprep.subr.mxu0 0.0
    %147 = vmatpush1.msra.mxu0 0.0
    %148 = vmatprep.subr.mxu0 0.0
    %149 = vmatpush1.msra.mxu0 0.0
    %150 = vmatprep.subr.mxu0 0.0
    %151 = vmatpush1.msra.mxu0 0.0
    %152 = vmatprep.subr.mxu0 0.0
    %153 = vmatpush1.msra.mxu0 0.0
    %154 = vmatprep.subr.mxu0 0.0
    %155 = vmatpush1.msra.mxu0 0.0
    %156 = vmatprep.subr.mxu0 0.0
    %157 = vmatpush1.msra.mxu0 0.0
    %158 = vmatprep.subr.mxu0 0.0
    %159 = vmatpush1.msra.mxu0 0.0
    %160 = vmatprep.subr.mxu0 0.0
    %161 = vmatpush1.msra.mxu0 0.0
    %162 = vmatprep.mubr.f32.mxu0 0.0
    %163 = vmatmul.mubr.f32.gmra.mrb[0].mxu0 %v93
    %v164 = vpop.f32.mrb[0].mxu0
    %v165 = vadd.f32 %v91, %v164
    %v166 = vpop.f32.mrb[0].mxu0
    %167 = vmatprep.mubr.f32.mxu0 0.0
    %168 = vmatmul.mubr.f32.gmra.mrb[0].mxu0 %v96
    %v169 = vpop.f32.mrb[0].mxu0
    %v170 = vadd.f32 %v91, %v169
    %v171 = vpop.f32.mrb[0].mxu0
    %172 = vdwg.mxu0
    %175 = vrot.lane.b32.xlu0 %v165, 120
    %v176 = vpop.permute.xlu0 %175
    %177 = vrot.lane.b32.xlu0 %v170, 120
    %v178 = vpop.permute.xlu0 %177
    %179 = vrot.lane.b32.xlu0 %v165, 112
    %v180 = vpop.permute.xlu0 %179
    %181 = vrot.lane.b32.xlu0 %v170, 112
    %v182 = vpop.permute.xlu0 %181
    %183 = vrot.lane.b32.xlu0 %v165, 104
    %v184 = vpop.permute.xlu0 %183
    %185 = vrot.lane.b32.xlu0 %v170, 104
    %v186 = vpop.permute.xlu0 %185
    %187 = vrot.lane.b32.xlu0 %v165, 96
    %v188 = vpop.permute.xlu0 %187
    %vm189 = vcmask 64512
    %v190 = vsel %vm189, %v165, 0
    %v192 = vsel %vm189, %v188, 0
    %194 = vmatprep.subr.mxu0 0.0
    %195 = vmatpush1.xpose.msra.mxu0 %v192
    %196 = vmatprep.subr.mxu0 0.0
    %197 = vmatpush1.xpose.msra.mxu0 0.0
    %198 = vmatprep.subr.mxu0 0.0
    %199 = vmatpush1.xpose.msra.mxu0 0.0
    %200 = vmatprep.subr.mxu0 0.0
    %201 = vmatpush1.xpose.msra.mxu0 0.0
    %202 = vmatprep.subr.mxu0 0.0
    %203 = vmatpush1.xpose.msra.mxu0 0.0
    %204 = vmatprep.subr.mxu0 0.0
    %205 = vmatpush1.xpose.msra.mxu0 0.0
    %206 = vmatprep.subr.mxu0 0.0
    %207 = vmatpush1.xpose.msra.mxu0 0.0
    %208 = vmatprep.subr.mxu0 0.0
    %209 = vmatpush1.xpose.msra.mxu0 0.0
    %210 = vmatprep.subr.mxu0 0.0
    %211 = vmatpush1.xpose.msra.mxu0 0.0
    %212 = vmatprep.subr.mxu0 0.0
    %213 = vmatpush1.xpose.msra.mxu0 0.0
    %214 = vmatprep.subr.mxu0 0.0
    %215 = vmatpush1.xpose.msra.mxu0 0.0
    %216 = vmatprep.subr.mxu0 0.0
    %217 = vmatpush1.xpose.msra.mxu0 0.0
    %218 = vmatprep.subr.mxu0 0.0
    %219 = vmatpush1.xpose.msra.mxu0 0.0
    %220 = vmatprep.subr.mxu0 0.0
    %221 = vmatpush1.xpose.msra.mxu0 0.0
    %222 = vmatprep.subr.mxu0 0.0
    %223 = vmatpush1.xpose.msra.mxu0 0.0
    %224 = vmatprep.subr.mxu0 0.0
    %225 = vmatpush1.xpose.msra.mxu0 0.0
    %226 = vmatprep.subr.mxu0 0.0
    %227 = vmatpush1.xpose.msra.mxu0 0.0
    %228 = vmatprep.subr.mxu0 0.0
    %229 = vmatpush1.xpose.msra.mxu0 0.0
    %230 = vmatprep.subr.mxu0 0.0
    %231 = vmatpush1.xpose.msra.mxu0 0.0
    %232 = vmatprep.subr.mxu0 0.0
    %233 = vmatpush1.xpose.msra.mxu0 0.0
    %234 = vmatprep.subr.mxu0 0.0
    %235 = vmatpush1.xpose.msra.mxu0 0.0
    %236 = vmatprep.subr.mxu0 0.0
    %237 = vmatpush1.xpose.msra.mxu0 0.0
    %238 = vmatprep.subr.mxu0 0.0
    %239 = vmatpush1.xpose.msra.mxu0 0.0
    %240 = vmatprep.subr.mxu0 0.0
    %241 = vmatpush1.xpose.msra.mxu0 0.0
    %242 = vmatprep.subr.mxu0 0.0
    %243 = vmatpush1.xpose.msra.mxu0 0.0
    %244 = vmatprep.subr.mxu0 0.0
    %245 = vmatpush1.xpose.msra.mxu0 0.0
    %246 = vmatprep.subr.mxu0 0.0
    %247 = vmatpush1.xpose.msra.mxu0 0.0
    %248 = vmatprep.subr.mxu0 0.0
    %249 = vmatpush1.xpose.msra.mxu0 0.0
    %250 = vmatprep.subr.mxu0 0.0
    %251 = vmatpush1.xpose.msra.mxu0 0.0
    %252 = vmatprep.subr.mxu0 0.0
    %253 = vmatpush1.xpose.msra.mxu0 0.0
    %254 = vmatprep.subr.mxu0 0.0
    %255 = vmatpush1.xpose.msra.mxu0 0.0
    %256 = vmatprep.subr.mxu0 0.0
    %257 = vmatpush1.xpose.msra.mxu0 0.0
    %258 = vmatprep.mubr.f32.mxu0 0.0
    %259 = vmatmul.mubr.f32.gmra.mrb[0].mxu0 %v190
    %v260 = vpop.f32.mrb[0].mxu0
    %v261 = vadd.f32 0.0, %v260
    %v262 = vpop.f32.mrb[0].mxu0
    %263 = vdwg.mxu0
    %264 = vrot.lane.b32.xlu0 %v170, 96
    %v265 = vpop.permute.xlu0 %264
    %v266 = vsel %vm189, %v170, 0
    %v268 = vsel %vm189, %v265, 0
    %270 = vmatprep.subr.mxu0 0.0
    %271 = vmatpush1.xpose.msra.mxu0 %v268
    %272 = vmatprep.subr.mxu0 0.0
    %273 = vmatpush1.xpose.msra.mxu0 0.0
    %274 = vmatprep.subr.mxu0 0.0
    %275 = vmatpush1.xpose.msra.mxu0 0.0
    %276 = vmatprep.subr.mxu0 0.0
    %277 = vmatpush1.xpose.msra.mxu0 0.0
    %278 = vmatprep.subr.mxu0 0.0
    %279 = vmatpush1.xpose.msra.mxu0 0.0
    %280 = vmatprep.subr.mxu0 0.0
    %281 = vmatpush1.xpose.msra.mxu0 0.0
    %282 = vmatprep.subr.mxu0 0.0
    %283 = vmatpush1.xpose.msra.mxu0 0.0
    %284 = vmatprep.subr.mxu0 0.0
    %285 = vmatpush1.xpose.msra.mxu0 0.0
    %286 = vmatprep.subr.mxu0 0.0
    %287 = vmatpush1.xpose.msra.mxu0 0.0
    %288 = vmatprep.subr.mxu0 0.0
    %289 = vmatpush1.xpose.msra.mxu0 0.0
    %290 = vmatprep.subr.mxu0 0.0
    %291 = vmatpush1.xpose.msra.mxu0 0.0
    %292 = vmatprep.subr.mxu0 0.0
    %293 = vmatpush1.xpose.msra.mxu0 0.0
    %294 = vmatprep.subr.mxu0 0.0
    %295 = vmatpush1.xpose.msra.mxu0 0.0
    %296 = vmatprep.subr.mxu0 0.0
    %297 = vmatpush1.xpose.msra.mxu0 0.0
    %298 = vmatprep.subr.mxu0 0.0
    %299 = vmatpush1.xpose.msra.mxu0 0.0
    %300 = vmatprep.subr.mxu0 0.0
    %301 = vmatpush1.xpose.msra.mxu0 0.0
    %302 = vmatprep.subr.mxu0 0.0
    %303 = vmatpush1.xpose.msra.mxu0 0.0
    %304 = vmatprep.subr.mxu0 0.0
    %305 = vmatpush1.xpose.msra.mxu0 0.0
    %306 = vmatprep.subr.mxu0 0.0
    %307 = vmatpush1.xpose.msra.mxu0 0.0
    %308 = vmatprep.subr.mxu0 0.0
    %309 = vmatpush1.xpose.msra.mxu0 0.0
    %310 = vmatprep.subr.mxu0 0.0
    %311 = vmatpush1.xpose.msra.mxu0 0.0
    %312 = vmatprep.subr.mxu0 0.0
    %313 = vmatpush1.xpose.msra.mxu0 0.0
    %314 = vmatprep.subr.mxu0 0.0
    %315 = vmatpush1.xpose.msra.mxu0 0.0
    %316 = vmatprep.subr.mxu0 0.0
    %317 = vmatpush1.xpose.msra.mxu0 0.0
    %318 = vmatprep.subr.mxu0 0.0
    %319 = vmatpush1.xpose.msra.mxu0 0.0
    %320 = vmatprep.subr.mxu0 0.0
    %321 = vmatpush1.xpose.msra.mxu0 0.0
    %322 = vmatprep.subr.mxu0 0.0
    %323 = vmatpush1.xpose.msra.mxu0 0.0
    %324 = vmatprep.subr.mxu0 0.0
    %325 = vmatpush1.xpose.msra.mxu0 0.0
    %326 = vmatprep.subr.mxu0 0.0
    %327 = vmatpush1.xpose.msra.mxu0 0.0
    %328 = vmatprep.subr.mxu0 0.0
    %329 = vmatpush1.xpose.msra.mxu0 0.0
    %330 = vmatprep.subr.mxu0 0.0
    %331 = vmatpush1.xpose.msra.mxu0 0.0
    %332 = vmatprep.subr.mxu0 0.0
    %333 = vmatpush1.xpose.msra.mxu0 0.0
    %334 = vmatprep.mubr.f32.mxu0 0.0
    %335 = vmatmul.mubr.f32.gmra.mrb[0].mxu0 %v266
    %v336 = vpop.f32.mrb[0].mxu0
    %v337 = vadd.f32 0.0, %v336
    %v338 = vpop.f32.mrb[0].mxu0
    %339 = vdwg.mxu0
    %340 = vrot.lane.b32.xlu0 %v176, 96
    %v341 = vpop.permute.xlu0 %340
    %v342 = vsel %vm189, %v176, 0
    %v344 = vsel %vm189, %v341, 0
    %346 = vmatprep.subr.mxu0 0.0
    %347 = vmatpush1.xpose.msra.mxu0 %v344
    %348 = vmatprep.subr.mxu0 0.0
    %349 = vmatpush1.xpose.msra.mxu0 0.0
    %350 = vmatprep.subr.mxu0 0.0
    %351 = vmatpush1.xpose.msra.mxu0 0.0
    %352 = vmatprep.subr.mxu0 0.0
    %353 = vmatpush1.xpose.msra.mxu0 0.0
    %354 = vmatprep.subr.mxu0 0.0
    %355 = vmatpush1.xpose.msra.mxu0 0.0
    %356 = vmatprep.subr.mxu0 0.0
    %357 = vmatpush1.xpose.msra.mxu0 0.0
    %358 = vmatprep.subr.mxu0 0.0
    %359 = vmatpush1.xpose.msra.mxu0 0.0
    %360 = vmatprep.subr.mxu0 0.0
    %361 = vmatpush1.xpose.msra.mxu0 0.0
    %362 = vmatprep.subr.mxu0 0.0
    %363 = vmatpush1.xpose.msra.mxu0 0.0
    %364 = vmatprep.subr.mxu0 0.0
    %365 = vmatpush1.xpose.msra.mxu0 0.0
    %366 = vmatprep.subr.mxu0 0.0
    %367 = vmatpush1.xpose.msra.mxu0 0.0
    %368 = vmatprep.subr.mxu0 0.0
    %369 = vmatpush1.xpose.msra.mxu0 0.0
    %370 = vmatprep.subr.mxu0 0.0
    %371 = vmatpush1.xpose.msra.mxu0 0.0
    %372 = vmatprep.subr.mxu0 0.0
    %373 = vmatpush1.xpose.msra.mxu0 0.0
    %374 = vmatprep.subr.mxu0 0.0
    %375 = vmatpush1.xpose.msra.mxu0 0.0
    %376 = vmatprep.subr.mxu0 0.0
    %377 = vmatpush1.xpose.msra.mxu0 0.0
    %378 = vmatprep.subr.mxu0 0.0
    %379 = vmatpush1.xpose.msra.mxu0 0.0
    %380 = vmatprep.subr.mxu0 0.0
    %381 = vmatpush1.xpose.msra.mxu0 0.0
    %382 = vmatprep.subr.mxu0 0.0
    %383 = vmatpush1.xpose.msra.mxu0 0.0
    %384 = vmatprep.subr.mxu0 0.0
    %385 = vmatpush1.xpose.msra.mxu0 0.0
    %386 = vmatprep.subr.mxu0 0.0
    %387 = vmatpush1.xpose.msra.mxu0 0.0
    %388 = vmatprep.subr.mxu0 0.0
    %389 = vmatpush1.xpose.msra.mxu0 0.0
    %390 = vmatprep.subr.mxu0 0.0
    %391 = vmatpush1.xpose.msra.mxu0 0.0
    %392 = vmatprep.subr.mxu0 0.0
    %393 = vmatpush1.xpose.msra.mxu0 0.0
    %394 = vmatprep.subr.mxu0 0.0
    %395 = vmatpush1.xpose.msra.mxu0 0.0
    %396 = vmatprep.subr.mxu0 0.0
    %397 = vmatpush1.xpose.msra.mxu0 0.0
    %398 = vmatprep.subr.mxu0 0.0
    %399 = vmatpush1.xpose.msra.mxu0 0.0
    %400 = vmatprep.subr.mxu0 0.0
    %401 = vmatpush1.xpose.msra.mxu0 0.0
    %402 = vmatprep.subr.mxu0 0.0
    %403 = vmatpush1.xpose.msra.mxu0 0.0
    %404 = vmatprep.subr.mxu0 0.0
    %405 = vmatpush1.xpose.msra.mxu0 0.0
    %406 = vmatprep.subr.mxu0 0.0
    %407 = vmatpush1.xpose.msra.mxu0 0.0
    %408 = vmatprep.subr.mxu0 0.0
    %409 = vmatpush1.xpose.msra.mxu0 0.0
    %410 = vmatprep.mubr.f32.mxu0 0.0
    %411 = vmatmul.mubr.f32.gmra.mrb[0].mxu0 %v342
    %v412 = vpop.f32.mrb[0].mxu0
    %v413 = vadd.f32 0.0, %v412
    %v414 = vpop.f32.mrb[0].mxu0
    %415 = vdwg.mxu0
    %416 = vrot.lane.b32.xlu0 %v178, 96
    %v417 = vpop.permute.xlu0 %416
    %v418 = vsel %vm189, %v178, 0
    %v420 = vsel %vm189, %v417, 0
    %422 = vmatprep.subr.mxu0 0.0
    %423 = vmatpush1.xpose.msra.mxu0 %v420
    %424 = vmatprep.subr.mxu0 0.0
    %425 = vmatpush1.xpose.msra.mxu0 0.0
    %426 = vmatprep.subr.mxu0 0.0
    %427 = vmatpush1.xpose.msra.mxu0 0.0
    %428 = vmatprep.subr.mxu0 0.0
    %429 = vmatpush1.xpose.msra.mxu0 0.0
    %430 = vmatprep.subr.mxu0 0.0
    %431 = vmatpush1.xpose.msra.mxu0 0.0
    %432 = vmatprep.subr.mxu0 0.0
    %433 = vmatpush1.xpose.msra.mxu0 0.0
    %434 = vmatprep.subr.mxu0 0.0
    %435 = vmatpush1.xpose.msra.mxu0 0.0
    %436 = vmatprep.subr.mxu0 0.0
    %437 = vmatpush1.xpose.msra.mxu0 0.0
    %438 = vmatprep.subr.mxu0 0.0
    %439 = vmatpush1.xpose.msra.mxu0 0.0
    %440 = vmatprep.subr.mxu0 0.0
    %441 = vmatpush1.xpose.msra.mxu0 0.0
    %442 = vmatprep.subr.mxu0 0.0
    %443 = vmatpush1.xpose.msra.mxu0 0.0
    %444 = vmatprep.subr.mxu0 0.0
    %445 = vmatpush1.xpose.msra.mxu0 0.0
    %446 = vmatprep.subr.mxu0 0.0
    %447 = vmatpush1.xpose.msra.mxu0 0.0
    %448 = vmatprep.subr.mxu0 0.0
    %449 = vmatpush1.xpose.msra.mxu0 0.0
    %450 = vmatprep.subr.mxu0 0.0
    %451 = vmatpush1.xpose.msra.mxu0 0.0
    %452 = vmatprep.subr.mxu0 0.0
    %453 = vmatpush1.xpose.msra.mxu0 0.0
    %454 = vmatprep.subr.mxu0 0.0
    %455 = vmatpush1.xpose.msra.mxu0 0.0
    %456 = vmatprep.subr.mxu0 0.0
    %457 = vmatpush1.xpose.msra.mxu0 0.0
    %458 = vmatprep.subr.mxu0 0.0
    %459 = vmatpush1.xpose.msra.mxu0 0.0
    %460 = vmatprep.subr.mxu0 0.0
    %461 = vmatpush1.xpose.msra.mxu0 0.0
    %462 = vmatprep.subr.mxu0 0.0
    %463 = vmatpush1.xpose.msra.mxu0 0.0
    %464 = vmatprep.subr.mxu0 0.0
    %465 = vmatpush1.xpose.msra.mxu0 0.0
    %466 = vmatprep.subr.mxu0 0.0
    %467 = vmatpush1.xpose.msra.mxu0 0.0
    %468 = vmatprep.subr.mxu0 0.0
    %469 = vmatpush1.xpose.msra.mxu0 0.0
    %470 = vmatprep.subr.mxu0 0.0
    %471 = vmatpush1.xpose.msra.mxu0 0.0
    %472 = vmatprep.subr.mxu0 0.0
    %473 = vmatpush1.xpose.msra.mxu0 0.0
    %474 = vmatprep.subr.mxu0 0.0
    %475 = vmatpush1.xpose.msra.mxu0 0.0
    %476 = vmatprep.subr.mxu0 0.0
    %477 = vmatpush1.xpose.msra.mxu0 0.0
    %478 = vmatprep.subr.mxu0 0.0
    %479 = vmatpush1.xpose.msra.mxu0 0.0
    %480 = vmatprep.subr.mxu0 0.0
    %481 = vmatpush1.xpose.msra.mxu0 0.0
    %482 = vmatprep.subr.mxu0 0.0
    %483 = vmatpush1.xpose.msra.mxu0 0.0
    %484 = vmatprep.subr.mxu0 0.0
    %485 = vmatpush1.xpose.msra.mxu0 0.0
    %486 = vmatprep.mubr.f32.mxu0 0.0
    %487 = vmatmul.mubr.f32.gmra.mrb[0].mxu0 %v418
    %v488 = vpop.f32.mrb[0].mxu0
    %v489 = vadd.f32 0.0, %v488
    %v490 = vpop.f32.mrb[0].mxu0
    %491 = vdwg.mxu0
    %492 = vrot.lane.b32.xlu0 %v180, 96
    %v493 = vpop.permute.xlu0 %492
    %v494 = vsel %vm189, %v180, 0
    %v496 = vsel %vm189, %v493, 0
    %498 = vmatprep.subr.mxu0 0.0
    %499 = vmatpush1.xpose.msra.mxu0 %v496
    %500 = vmatprep.subr.mxu0 0.0
    %501 = vmatpush1.xpose.msra.mxu0 0.0
    %502 = vmatprep.subr.mxu0 0.0
    %503 = vmatpush1.xpose.msra.mxu0 0.0
    %504 = vmatprep.subr.mxu0 0.0
    %505 = vmatpush1.xpose.msra.mxu0 0.0
    %506 = vmatprep.subr.mxu0 0.0
    %507 = vmatpush1.xpose.msra.mxu0 0.0
    %508 = vmatprep.subr.mxu0 0.0
    %509 = vmatpush1.xpose.msra.mxu0 0.0
    %510 = vmatprep.subr.mxu0 0.0
    %511 = vmatpush1.xpose.msra.mxu0 0.0
    %512 = vmatprep.subr.mxu0 0.0
    %513 = vmatpush1.xpose.msra.mxu0 0.0
    %514 = vmatprep.subr.mxu0 0.0
    %515 = vmatpush1.xpose.msra.mxu0 0.0
    %516 = vmatprep.subr.mxu0 0.0
    %517 = vmatpush1.xpose.msra.mxu0 0.0
    %518 = vmatprep.subr.mxu0 0.0
    %519 = vmatpush1.xpose.msra.mxu0 0.0
    %520 = vmatprep.subr.mxu0 0.0
    %521 = vmatpush1.xpose.msra.mxu0 0.0
    %522 = vmatprep.subr.mxu0 0.0
    %523 = vmatpush1.xpose.msra.mxu0 0.0
    %524 = vmatprep.subr.mxu0 0.0
    %525 = vmatpush1.xpose.msra.mxu0 0.0
    %526 = vmatprep.subr.mxu0 0.0
    %527 = vmatpush1.xpose.msra.mxu0 0.0
    %528 = vmatprep.subr.mxu0 0.0
    %529 = vmatpush1.xpose.msra.mxu0 0.0
    %530 = vmatprep.subr.mxu0 0.0
    %531 = vmatpush1.xpose.msra.mxu0 0.0
    %532 = vmatprep.subr.mxu0 0.0
    %533 = vmatpush1.xpose.msra.mxu0 0.0
    %534 = vmatprep.subr.mxu0 0.0
    %535 = vmatpush1.xpose.msra.mxu0 0.0
    %536 = vmatprep.subr.mxu0 0.0
    %537 = vmatpush1.xpose.msra.mxu0 0.0
    %538 = vmatprep.subr.mxu0 0.0
    %539 = vmatpush1.xpose.msra.mxu0 0.0
    %540 = vmatprep.subr.mxu0 0.0
    %541 = vmatpush1.xpose.msra.mxu0 0.0
    %542 = vmatprep.subr.mxu0 0.0
    %543 = vmatpush1.xpose.msra.mxu0 0.0
    %544 = vmatprep.subr.mxu0 0.0
    %545 = vmatpush1.xpose.msra.mxu0 0.0
    %546 = vmatprep.subr.mxu0 0.0
    %547 = vmatpush1.xpose.msra.mxu0 0.0
    %548 = vmatprep.subr.mxu0 0.0
    %549 = vmatpush1.xpose.msra.mxu0 0.0
    %550 = vmatprep.subr.mxu0 0.0
    %551 = vmatpush1.xpose.msra.mxu0 0.0
    %552 = vmatprep.subr.mxu0 0.0
    %553 = vmatpush1.xpose.msra.mxu0 0.0
    %554 = vmatprep.subr.mxu0 0.0
    %555 = vmatpush1.xpose.msra.mxu0 0.0
    %556 = vmatprep.subr.mxu0 0.0
    %557 = vmatpush1.xpose.msra.mxu0 0.0
    %558 = vmatprep.subr.mxu0 0.0
    %559 = vmatpush1.xpose.msra.mxu0 0.0
    %560 = vmatprep.subr.mxu0 0.0
    %561 = vmatpush1.xpose.msra.mxu0 0.0
    %562 = vmatprep.mubr.f32.mxu0 0.0
    %563 = vmatmul.mubr.f32.gmra.mrb[0].mxu0 %v494
    %v564 = vpop.f32.mrb[0].mxu0
    %v565 = vadd.f32 0.0, %v564
    %v566 = vpop.f32.mrb[0].mxu0
    %567 = vdwg.mxu0
    %568 = vrot.lane.b32.xlu0 %v182, 96
    %v569 = vpop.permute.xlu0 %568
    %v570 = vsel %vm189, %v182, 0
    %v572 = vsel %vm189, %v569, 0
    %574 = vmatprep.subr.mxu0 0.0
    %575 = vmatpush1.xpose.msra.mxu0 %v572
    %576 = vmatprep.subr.mxu0 0.0
    %577 = vmatpush1.xpose.msra.mxu0 0.0
    %578 = vmatprep.subr.mxu0 0.0
    %579 = vmatpush1.xpose.msra.mxu0 0.0
    %580 = vmatprep.subr.mxu0 0.0
    %581 = vmatpush1.xpose.msra.mxu0 0.0
    %582 = vmatprep.subr.mxu0 0.0
    %583 = vmatpush1.xpose.msra.mxu0 0.0
    %584 = vmatprep.subr.mxu0 0.0
    %585 = vmatpush1.xpose.msra.mxu0 0.0
    %586 = vmatprep.subr.mxu0 0.0
    %587 = vmatpush1.xpose.msra.mxu0 0.0
    %588 = vmatprep.subr.mxu0 0.0
    %589 = vmatpush1.xpose.msra.mxu0 0.0
    %590 = vmatprep.subr.mxu0 0.0
    %591 = vmatpush1.xpose.msra.mxu0 0.0
    %592 = vmatprep.subr.mxu0 0.0
    %593 = vmatpush1.xpose.msra.mxu0 0.0
    %594 = vmatprep.subr.mxu0 0.0
    %595 = vmatpush1.xpose.msra.mxu0 0.0
    %596 = vmatprep.subr.mxu0 0.0
    %597 = vmatpush1.xpose.msra.mxu0 0.0
    %598 = vmatprep.subr.mxu0 0.0
    %599 = vmatpush1.xpose.msra.mxu0 0.0
    %600 = vmatprep.subr.mxu0 0.0
    %601 = vmatpush1.xpose.msra.mxu0 0.0
    %602 = vmatprep.subr.mxu0 0.0
    %603 = vmatpush1.xpose.msra.mxu0 0.0
    %604 = vmatprep.subr.mxu0 0.0
    %605 = vmatpush1.xpose.msra.mxu0 0.0
    %606 = vmatprep.subr.mxu0 0.0
    %607 = vmatpush1.xpose.msra.mxu0 0.0
    %608 = vmatprep.subr.mxu0 0.0
    %609 = vmatpush1.xpose.msra.mxu0 0.0
    %610 = vmatprep.subr.mxu0 0.0
    %611 = vmatpush1.xpose.msra.mxu0 0.0
    %612 = vmatprep.subr.mxu0 0.0
    %613 = vmatpush1.xpose.msra.mxu0 0.0
    %614 = vmatprep.subr.mxu0 0.0
    %615 = vmatpush1.xpose.msra.mxu0 0.0
    %616 = vmatprep.subr.mxu0 0.0
    %617 = vmatpush1.xpose.msra.mxu0 0.0
    %618 = vmatprep.subr.mxu0 0.0
    %619 = vmatpush1.xpose.msra.mxu0 0.0
    %620 = vmatprep.subr.mxu0 0.0
    %621 = vmatpush1.xpose.msra.mxu0 0.0
    %622 = vmatprep.subr.mxu0 0.0
    %623 = vmatpush1.xpose.msra.mxu0 0.0
    %624 = vmatprep.subr.mxu0 0.0
    %625 = vmatpush1.xpose.msra.mxu0 0.0
    %626 = vmatprep.subr.mxu0 0.0
    %627 = vmatpush1.xpose.msra.mxu0 0.0
    %628 = vmatprep.subr.mxu0 0.0
    %629 = vmatpush1.xpose.msra.mxu0 0.0
    %630 = vmatprep.subr.mxu0 0.0
    %631 = vmatpush1.xpose.msra.mxu0 0.0
    %632 = vmatprep.subr.mxu0 0.0
    %633 = vmatpush1.xpose.msra.mxu0 0.0
    %634 = vmatprep.subr.mxu0 0.0
    %635 = vmatpush1.xpose.msra.mxu0 0.0
    %636 = vmatprep.subr.mxu0 0.0
    %637 = vmatpush1.xpose.msra.mxu0 0.0
    %638 = vmatprep.mubr.f32.mxu0 0.0
    %639 = vmatmul.mubr.f32.gmra.mrb[0].mxu0 %v570
    %v640 = vpop.f32.mrb[0].mxu0
    %v641 = vadd.f32 0.0, %v640
    %v642 = vpop.f32.mrb[0].mxu0
    %643 = vdwg.mxu0
    %644 = vrot.lane.b32.xlu0 %v184, 96
    %v645 = vpop.permute.xlu0 %644
    %v646 = vsel %vm189, %v184, 0
    %v648 = vsel %vm189, %v645, 0
    %650 = vmatprep.subr.mxu0 0.0
    %651 = vmatpush1.xpose.msra.mxu0 %v648
    %652 = vmatprep.subr.mxu0 0.0
    %653 = vmatpush1.xpose.msra.mxu0 0.0
    %654 = vmatprep.subr.mxu0 0.0
    %655 = vmatpush1.xpose.msra.mxu0 0.0
    %656 = vmatprep.subr.mxu0 0.0
    %657 = vmatpush1.xpose.msra.mxu0 0.0
    %658 = vmatprep.subr.mxu0 0.0
    %659 = vmatpush1.xpose.msra.mxu0 0.0
    %660 = vmatprep.subr.mxu0 0.0
    %661 = vmatpush1.xpose.msra.mxu0 0.0
    %662 = vmatprep.subr.mxu0 0.0
    %663 = vmatpush1.xpose.msra.mxu0 0.0
    %664 = vmatprep.subr.mxu0 0.0
    %665 = vmatpush1.xpose.msra.mxu0 0.0
    %666 = vmatprep.subr.mxu0 0.0
    %667 = vmatpush1.xpose.msra.mxu0 0.0
    %668 = vmatprep.subr.mxu0 0.0
    %669 = vmatpush1.xpose.msra.mxu0 0.0
    %670 = vmatprep.subr.mxu0 0.0
    %671 = vmatpush1.xpose.msra.mxu0 0.0
    %672 = vmatprep.subr.mxu0 0.0
    %673 = vmatpush1.xpose.msra.mxu0 0.0
    %674 = vmatprep.subr.mxu0 0.0
    %675 = vmatpush1.xpose.msra.mxu0 0.0
    %676 = vmatprep.subr.mxu0 0.0
    %677 = vmatpush1.xpose.msra.mxu0 0.0
    %678 = vmatprep.subr.mxu0 0.0
    %679 = vmatpush1.xpose.msra.mxu0 0.0
    %680 = vmatprep.subr.mxu0 0.0
    %681 = vmatpush1.xpose.msra.mxu0 0.0
    %682 = vmatprep.subr.mxu0 0.0
    %683 = vmatpush1.xpose.msra.mxu0 0.0
    %684 = vmatprep.subr.mxu0 0.0
    %685 = vmatpush1.xpose.msra.mxu0 0.0
    %686 = vmatprep.subr.mxu0 0.0
    %687 = vmatpush1.xpose.msra.mxu0 0.0
    %688 = vmatprep.subr.mxu0 0.0
    %689 = vmatpush1.xpose.msra.mxu0 0.0
    %690 = vmatprep.subr.mxu0 0.0
    %691 = vmatpush1.xpose.msra.mxu0 0.0
    %692 = vmatprep.subr.mxu0 0.0
    %693 = vmatpush1.xpose.msra.mxu0 0.0
    %694 = vmatprep.subr.mxu0 0.0
    %695 = vmatpush1.xpose.msra.mxu0 0.0
    %696 = vmatprep.subr.mxu0 0.0
    %697 = vmatpush1.xpose.msra.mxu0 0.0
    %698 = vmatprep.subr.mxu0 0.0
    %699 = vmatpush1.xpose.msra.mxu0 0.0
    %700 = vmatprep.subr.mxu0 0.0
    %701 = vmatpush1.xpose.msra.mxu0 0.0
    %702 = vmatprep.subr.mxu0 0.0
    %703 = vmatpush1.xpose.msra.mxu0 0.0
    %704 = vmatprep.subr.mxu0 0.0
    %705 = vmatpush1.xpose.msra.mxu0 0.0
    %706 = vmatprep.subr.mxu0 0.0
    %707 = vmatpush1.xpose.msra.mxu0 0.0
    %708 = vmatprep.subr.mxu0 0.0
    %709 = vmatpush1.xpose.msra.mxu0 0.0
    %710 = vmatprep.subr.mxu0 0.0
    %711 = vmatpush1.xpose.msra.mxu0 0.0
    %712 = vmatprep.subr.mxu0 0.0
    %713 = vmatpush1.xpose.msra.mxu0 0.0
    %714 = vmatprep.mubr.f32.mxu0 0.0
    %715 = vmatmul.mubr.f32.gmra.mrb[0].mxu0 %v646
    %v716 = vpop.f32.mrb[0].mxu0
    %v717 = vadd.f32 0.0, %v716
    %v718 = vpop.f32.mrb[0].mxu0
    %719 = vdwg.mxu0
    %720 = vrot.lane.b32.xlu0 %v186, 96
    %v721 = vpop.permute.xlu0 %720
    %v722 = vsel %vm189, %v186, 0
    %v724 = vsel %vm189, %v721, 0
    %726 = vmatprep.subr.mxu0 0.0
    %727 = vmatpush1.xpose.msra.mxu0 %v724
    %728 = vmatprep.subr.mxu0 0.0
    %729 = vmatpush1.xpose.msra.mxu0 0.0
    %730 = vmatprep.subr.mxu0 0.0
    %731 = vmatpush1.xpose.msra.mxu0 0.0
    %732 = vmatprep.subr.mxu0 0.0
    %733 = vmatpush1.xpose.msra.mxu0 0.0
    %734 = vmatprep.subr.mxu0 0.0
    %735 = vmatpush1.xpose.msra.mxu0 0.0
    %736 = vmatprep.subr.mxu0 0.0
    %737 = vmatpush1.xpose.msra.mxu0 0.0
    %738 = vmatprep.subr.mxu0 0.0
    %739 = vmatpush1.xpose.msra.mxu0 0.0
    %740 = vmatprep.subr.mxu0 0.0
    %741 = vmatpush1.xpose.msra.mxu0 0.0
    %742 = vmatprep.subr.mxu0 0.0
    %743 = vmatpush1.xpose.msra.mxu0 0.0
    %744 = vmatprep.subr.mxu0 0.0
    %745 = vmatpush1.xpose.msra.mxu0 0.0
    %746 = vmatprep.subr.mxu0 0.0
    %747 = vmatpush1.xpose.msra.mxu0 0.0
    %748 = vmatprep.subr.mxu0 0.0
    %749 = vmatpush1.xpose.msra.mxu0 0.0
    %750 = vmatprep.subr.mxu0 0.0
    %751 = vmatpush1.xpose.msra.mxu0 0.0
    %752 = vmatprep.subr.mxu0 0.0
    %753 = vmatpush1.xpose.msra.mxu0 0.0
    %754 = vmatprep.subr.mxu0 0.0
    %755 = vmatpush1.xpose.msra.mxu0 0.0
    %756 = vmatprep.subr.mxu0 0.0
    %757 = vmatpush1.xpose.msra.mxu0 0.0
    %758 = vmatprep.subr.mxu0 0.0
    %759 = vmatpush1.xpose.msra.mxu0 0.0
    %760 = vmatprep.subr.mxu0 0.0
    %761 = vmatpush1.xpose.msra.mxu0 0.0
    %762 = vmatprep.subr.mxu0 0.0
    %763 = vmatpush1.xpose.msra.mxu0 0.0
    %764 = vmatprep.subr.mxu0 0.0
    %765 = vmatpush1.xpose.msra.mxu0 0.0
    %766 = vmatprep.subr.mxu0 0.0
    %767 = vmatpush1.xpose.msra.mxu0 0.0
    %768 = vmatprep.subr.mxu0 0.0
    %769 = vmatpush1.xpose.msra.mxu0 0.0
    %770 = vmatprep.subr.mxu0 0.0
    %771 = vmatpush1.xpose.msra.mxu0 0.0
    %772 = vmatprep.subr.mxu0 0.0
    %773 = vmatpush1.xpose.msra.mxu0 0.0
    %774 = vmatprep.subr.mxu0 0.0
    %775 = vmatpush1.xpose.msra.mxu0 0.0
    %776 = vmatprep.subr.mxu0 0.0
    %777 = vmatpush1.xpose.msra.mxu0 0.0
    %778 = vmatprep.subr.mxu0 0.0
    %779 = vmatpush1.xpose.msra.mxu0 0.0
    %780 = vmatprep.subr.mxu0 0.0
    %781 = vmatpush1.xpose.msra.mxu0 0.0
    %782 = vmatprep.subr.mxu0 0.0
    %783 = vmatpush1.xpose.msra.mxu0 0.0
    %784 = vmatprep.subr.mxu0 0.0
    %785 = vmatpush1.xpose.msra.mxu0 0.0
    %786 = vmatprep.subr.mxu0 0.0
    %787 = vmatpush1.xpose.msra.mxu0 0.0
    %788 = vmatprep.subr.mxu0 0.0
    %789 = vmatpush1.xpose.msra.mxu0 0.0
    %790 = vmatprep.mubr.f32.mxu0 0.0
    %791 = vmatmul.mubr.f32.gmra.mrb[0].mxu0 %v722
    %v792 = vpop.f32.mrb[0].mxu0
    %v793 = vadd.f32 0.0, %v792
    %v794 = vpop.f32.mrb[0].mxu0
    %795 = vdwg.mxu0
    %v796 = vsel %vm189, %v261, -inf
    %797 = vmax.xlane.f32.xlu0 %v796
    %v798 = vpop.xlane.xlu0 %797
    %v799 = vsel %vm189, %v337, -inf
    %800 = vmax.xlane.f32.xlu0 %v799
    %v801 = vpop.xlane.xlu0 %800
    %v802 = vsel %vm189, %v413, -inf
    %803 = vmax.xlane.f32.xlu0 %v802
    %v804 = vpop.xlane.xlu0 %803
    %v805 = vsel %vm189, %v489, -inf
    %806 = vmax.xlane.f32.xlu0 %v805
    %v807 = vpop.xlane.xlu0 %806
    %v808 = vsel %vm189, %v565, -inf
    %809 = vmax.xlane.f32.xlu0 %v808
    %v810 = vpop.xlane.xlu0 %809
    %v811 = vsel %vm189, %v641, -inf
    %812 = vmax.xlane.f32.xlu0 %v811
    %v813 = vpop.xlane.xlu0 %812
    %v814 = vsel %vm189, %v717, -inf
    %815 = vmax.xlane.f32.xlu0 %v814
    %v816 = vpop.xlane.xlu0 %815
    %v817 = vsel %vm189, %v793, -inf
    %818 = vmax.xlane.f32.xlu0 %v817
    %v819 = vpop.xlane.xlu0 %818
    %v820 = vsub.f32 %v261, %v798
    %v821 = vsub.f32 %v337, %v801
    %v822 = vsub.f32 %v413, %v804
    %v823 = vsub.f32 %v489, %v807
    %v824 = vsub.f32 %v565, %v810
    %v825 = vsub.f32 %v641, %v813
    %v826 = vsub.f32 %v717, %v816
    %v827 = vsub.f32 %v793, %v819
    %v828 = vmul.f32 %v820, 1.442695
    %v829 = vpow.pop %v828
    %v830 = vmul.f32 %v821, 1.442695
    %v831 = vpow.pop %v830
    %v832 = vmul.f32 %v822, 1.442695
    %v833 = vpow.pop %v832
    %v834 = vmul.f32 %v823, 1.442695
    %v835 = vpow.pop %v834
    %v836 = vmul.f32 %v824, 1.442695
    %v837 = vpow.pop %v836
    %v838 = vmul.f32 %v825, 1.442695
    %v839 = vpow.pop %v838
    %v840 = vmul.f32 %v826, 1.442695
    %v841 = vpow.pop %v840
    %v842 = vmul.f32 %v827, 1.442695
    %v843 = vpow.pop %v842
    %v844 = vsel %vm189, %v829, 0.0
    %845 = vadd.xlane.f32.xlu0 %v844
    %v846 = vpop.xlane.xlu0 %845
    %v847 = vsel %vm189, %v831, 0.0
    %848 = vadd.xlane.f32.xlu0 %v847
    %v849 = vpop.xlane.xlu0 %848
    %v850 = vsel %vm189, %v833, 0.0
    %851 = vadd.xlane.f32.xlu0 %v850
    %v852 = vpop.xlane.xlu0 %851
    %v853 = vsel %vm189, %v835, 0.0
    %854 = vadd.xlane.f32.xlu0 %v853
    %v855 = vpop.xlane.xlu0 %854
    %v856 = vsel %vm189, %v837, 0.0
    %857 = vadd.xlane.f32.xlu0 %v856
    %v858 = vpop.xlane.xlu0 %857
    %v859 = vsel %vm189, %v839, 0.0
    %860 = vadd.xlane.f32.xlu0 %v859
    %v861 = vpop.xlane.xlu0 %860
    %v862 = vsel %vm189, %v841, 0.0
    %863 = vadd.xlane.f32.xlu0 %v862
    %v864 = vpop.xlane.xlu0 %863
    %v865 = vsel %vm189, %v843, 0.0
    %866 = vadd.xlane.f32.xlu0 %v865
    %v867 = vpop.xlane.xlu0 %866
    %v868 = vrcp.pop %v846
    %v869 = vrcp.pop %v849
    %v870 = vrcp.pop %v852
    %v871 = vrcp.pop %v855
    %v872 = vrcp.pop %v858
    %v873 = vrcp.pop %v861
    %v874 = vrcp.pop %v864
    %v875 = vrcp.pop %v867
    %v876 = vmul.f32 %v829, %v868
    %v877 = vmul.f32 %v831, %v869
    %v878 = vmul.f32 %v833, %v870
    %v879 = vmul.f32 %v835, %v871
    %v880 = vmul.f32 %v837, %v872
    %v881 = vmul.f32 %v839, %v873
    %v882 = vmul.f32 %v841, %v874
    %v883 = vmul.f32 %v843, %v875
    %884 = vrot.lane.b32.xlu0 %v165, 64
    %v885 = vpop.permute.xlu0 %884
    %v888 = vsel %vm189, %v876, 0
    %890 = vmatprep.subr.mxu0 0.0
    %891 = vmatpush1.msra.mxu0 %v885
    %892 = vmatprep.subr.mxu0 0.0
    %893 = vmatpush1.msra.mxu0 0.0
    %894 = vmatprep.subr.mxu0 0.0
    %895 = vmatpush1.msra.mxu0 0.0
    %896 = vmatprep.subr.mxu0 0.0
    %897 = vmatpush1.msra.mxu0 0.0
    %898 = vmatprep.subr.mxu0 0.0
    %899 = vmatpush1.msra.mxu0 0.0
    %900 = vmatprep.subr.mxu0 0.0
    %901 = vmatpush1.msra.mxu0 0.0
    %902 = vmatprep.subr.mxu0 0.0
    %903 = vmatpush1.msra.mxu0 0.0
    %904 = vmatprep.subr.mxu0 0.0
    %905 = vmatpush1.msra.mxu0 0.0
    %906 = vmatprep.subr.mxu0 0.0
    %907 = vmatpush1.msra.mxu0 0.0
    %908 = vmatprep.subr.mxu0 0.0
    %909 = vmatpush1.msra.mxu0 0.0
    %910 = vmatprep.subr.mxu0 0.0
    %911 = vmatpush1.msra.mxu0 0.0
    %912 = vmatprep.subr.mxu0 0.0
    %913 = vmatpush1.msra.mxu0 0.0
    %914 = vmatprep.subr.mxu0 0.0
    %915 = vmatpush1.msra.mxu0 0.0
    %916 = vmatprep.subr.mxu0 0.0
    %917 = vmatpush1.msra.mxu0 0.0
    %918 = vmatprep.subr.mxu0 0.0
    %919 = vmatpush1.msra.mxu0 0.0
    %920 = vmatprep.subr.mxu0 0.0
    %921 = vmatpush1.msra.mxu0 0.0
    %922 = vmatprep.subr.mxu0 0.0
    %923 = vmatpush1.msra.mxu0 0.0
    %924 = vmatprep.subr.mxu0 0.0
    %925 = vmatpush1.msra.mxu0 0.0
    %926 = vmatprep.subr.mxu0 0.0
    %927 = vmatpush1.msra.mxu0 0.0
    %928 = vmatprep.subr.mxu0 0.0
    %929 = vmatpush1.msra.mxu0 0.0
    %930 = vmatprep.subr.mxu0 0.0
    %931 = vmatpush1.msra.mxu0 0.0
    %932 = vmatprep.subr.mxu0 0.0
    %933 = vmatpush1.msra.mxu0 0.0
    %934 = vmatprep.subr.mxu0 0.0
    %935 = vmatpush1.msra.mxu0 0.0
    %936 = vmatprep.subr.mxu0 0.0
    %937 = vmatpush1.msra.mxu0 0.0
    %938 = vmatprep.subr.mxu0 0.0
    %939 = vmatpush1.msra.mxu0 0.0
    %940 = vmatprep.subr.mxu0 0.0
    %941 = vmatpush1.msra.mxu0 0.0
    %942 = vmatprep.subr.mxu0 0.0
    %943 = vmatpush1.msra.mxu0 0.0
    %944 = vmatprep.subr.mxu0 0.0
    %945 = vmatpush1.msra.mxu0 0.0
    %946 = vmatprep.subr.mxu0 0.0
    %947 = vmatpush1.msra.mxu0 0.0
    %948 = vmatprep.subr.mxu0 0.0
    %949 = vmatpush1.msra.mxu0 0.0
    %950 = vmatprep.subr.mxu0 0.0
    %951 = vmatpush1.msra.mxu0 0.0
    %952 = vmatprep.subr.mxu0 0.0
    %953 = vmatpush1.msra.mxu0 0.0
    %954 = vmatprep.mubr.f32.mxu0 0.0
    %955 = vmatmul.mubr.f32.gmra.mrb[0].mxu0 %v888
    %v956 = vpop.f32.mrb[0].mxu0
    %v957 = vadd.f32 0.0, %v956
    %v958 = vpop.f32.mrb[0].mxu0
    %959 = vdwg.mxu0
    %960 = vrot.lane.b32.xlu0 %v170, 64
    %v961 = vpop.permute.xlu0 %960
    %v964 = vsel %vm189, %v877, 0
    %966 = vmatprep.subr.mxu0 0.0
    %967 = vmatpush1.msra.mxu0 %v961
    %968 = vmatprep.subr.mxu0 0.0
    %969 = vmatpush1.msra.mxu0 0.0
    %970 = vmatprep.subr.mxu0 0.0
    %971 = vmatpush1.msra.mxu0 0.0
    %972 = vmatprep.subr.mxu0 0.0
    %973 = vmatpush1.msra.mxu0 0.0
    %974 = vmatprep.subr.mxu0 0.0
    %975 = vmatpush1.msra.mxu0 0.0
    %976 = vmatprep.subr.mxu0 0.0
    %977 = vmatpush1.msra.mxu0 0.0
    %978 = vmatprep.subr.mxu0 0.0
    %979 = vmatpush1.msra.mxu0 0.0
    %980 = vmatprep.subr.mxu0 0.0
    %981 = vmatpush1.msra.mxu0 0.0
    %982 = vmatprep.subr.mxu0 0.0
    %983 = vmatpush1.msra.mxu0 0.0
    %984 = vmatprep.subr.mxu0 0.0
    %985 = vmatpush1.msra.mxu0 0.0
    %986 = vmatprep.subr.mxu0 0.0
    %987 = vmatpush1.msra.mxu0 0.0
    %988 = vmatprep.subr.mxu0 0.0
    %989 = vmatpush1.msra.mxu0 0.0
    %990 = vmatprep.subr.mxu0 0.0
    %991 = vmatpush1.msra.mxu0 0.0
    %992 = vmatprep.subr.mxu0 0.0
    %993 = vmatpush1.msra.mxu0 0.0
    %994 = vmatprep.subr.mxu0 0.0
    %995 = vmatpush1.msra.mxu0 0.0
    %996 = vmatprep.subr.mxu0 0.0
    %997 = vmatpush1.msra.mxu0 0.0
    %998 = vmatprep.subr.mxu0 0.0
    %999 = vmatpush1.msra.mxu0 0.0
    %1000 = vmatprep.subr.mxu0 0.0
    %1001 = vmatpush1.msra.mxu0 0.0
    %1002 = vmatprep.subr.mxu0 0.0
    %1003 = vmatpush1.msra.mxu0 0.0
    %1004 = vmatprep.subr.mxu0 0.0
    %1005 = vmatpush1.msra.mxu0 0.0
    %1006 = vmatprep.subr.mxu0 0.0
    %1007 = vmatpush1.msra.mxu0 0.0
    %1008 = vmatprep.subr.mxu0 0.0
    %1009 = vmatpush1.msra.mxu0 0.0
    %1010 = vmatprep.subr.mxu0 0.0
    %1011 = vmatpush1.msra.mxu0 0.0
    %1012 = vmatprep.subr.mxu0 0.0
    %1013 = vmatpush1.msra.mxu0 0.0
    %1014 = vmatprep.subr.mxu0 0.0
    %1015 = vmatpush1.msra.mxu0 0.0
    %1016 = vmatprep.subr.mxu0 0.0
    %1017 = vmatpush1.msra.mxu0 0.0
    %1018 = vmatprep.subr.mxu0 0.0
    %1019 = vmatpush1.msra.mxu0 0.0
    %1020 = vmatprep.subr.mxu0 0.0
    %1021 = vmatpush1.msra.mxu0 0.0
    %1022 = vmatprep.subr.mxu0 0.0
    %1023 = vmatpush1.msra.mxu0 0.0
    %1024 = vmatprep.subr.mxu0 0.0
    %1025 = vmatpush1.msra.mxu0 0.0
    %1026 = vmatprep.subr.mxu0 0.0
    %1027 = vmatpush1.msra.mxu0 0.0
    %1028 = vmatprep.subr.mxu0 0.0
    %1029 = vmatpush1.msra.mxu0 0.0
    %1030 = vmatprep.mubr.f32.mxu0 0.0
    %1031 = vmatmul.mubr.f32.gmra.mrb[0].mxu0 %v964
    %v1032 = vpop.f32.mrb[0].mxu0
    %v1033 = vadd.f32 0.0, %v1032
    %v1034 = vpop.f32.mrb[0].mxu0
    %1035 = vdwg.mxu0
    %1036 = vrot.lane.b32.xlu0 %v176, 64
    %v1037 = vpop.permute.xlu0 %1036
    %v1040 = vsel %vm189, %v878, 0
    %1042 = vmatprep.subr.mxu0 0.0
    %1043 = vmatpush1.msra.mxu0 %v1037
    %1044 = vmatprep.subr.mxu0 0.0
    %1045 = vmatpush1.msra.mxu0 0.0
    %1046 = vmatprep.subr.mxu0 0.0
    %1047 = vmatpush1.msra.mxu0 0.0
    %1048 = vmatprep.subr.mxu0 0.0
    %1049 = vmatpush1.msra.mxu0 0.0
    %1050 = vmatprep.subr.mxu0 0.0
    %1051 = vmatpush1.msra.mxu0 0.0
    %1052 = vmatprep.subr.mxu0 0.0
    %1053 = vmatpush1.msra.mxu0 0.0
    %1054 = vmatprep.subr.mxu0 0.0
    %1055 = vmatpush1.msra.mxu0 0.0
    %1056 = vmatprep.subr.mxu0 0.0
    %1057 = vmatpush1.msra.mxu0 0.0
    %1058 = vmatprep.subr.mxu0 0.0
    %1059 = vmatpush1.msra.mxu0 0.0
    %1060 = vmatprep.subr.mxu0 0.0
    %1061 = vmatpush1.msra.mxu0 0.0
    %1062 = vmatprep.subr.mxu0 0.0
    %1063 = vmatpush1.msra.mxu0 0.0
    %1064 = vmatprep.subr.mxu0 0.0
    %1065 = vmatpush1.msra.mxu0 0.0
    %1066 = vmatprep.subr.mxu0 0.0
    %1067 = vmatpush1.msra.mxu0 0.0
    %1068 = vmatprep.subr.mxu0 0.0
    %1069 = vmatpush1.msra.mxu0 0.0
    %1070 = vmatprep.subr.mxu0 0.0
    %1071 = vmatpush1.msra.mxu0 0.0
    %1072 = vmatprep.subr.mxu0 0.0
    %1073 = vmatpush1.msra.mxu0 0.0
    %1074 = vmatprep.subr.mxu0 0.0
    %1075 = vmatpush1.msra.mxu0 0.0
    %1076 = vmatprep.subr.mxu0 0.0
    %1077 = vmatpush1.msra.mxu0 0.0
    %1078 = vmatprep.subr.mxu0 0.0
    %1079 = vmatpush1.msra.mxu0 0.0
    %1080 = vmatprep.subr.mxu0 0.0
    %1081 = vmatpush1.msra.mxu0 0.0
    %1082 = vmatprep.subr.mxu0 0.0
    %1083 = vmatpush1.msra.mxu0 0.0
    %1084 = vmatprep.subr.mxu0 0.0
    %1085 = vmatpush1.msra.mxu0 0.0
    %1086 = vmatprep.subr.mxu0 0.0
    %1087 = vmatpush1.msra.mxu0 0.0
    %1088 = vmatprep.subr.mxu0 0.0
    %1089 = vmatpush1.msra.mxu0 0.0
    %1090 = vmatprep.subr.mxu0 0.0
    %1091 = vmatpush1.msra.mxu0 0.0
    %1092 = vmatprep.subr.mxu0 0.0
    %1093 = vmatpush1.msra.mxu0 0.0
    %1094 = vmatprep.subr.mxu0 0.0
    %1095 = vmatpush1.msra.mxu0 0.0
    %1096 = vmatprep.subr.mxu0 0.0
    %1097 = vmatpush1.msra.mxu0 0.0
    %1098 = vmatprep.subr.mxu0 0.0
    %1099 = vmatpush1.msra.mxu0 0.0
    %1100 = vmatprep.subr.mxu0 0.0
    %1101 = vmatpush1.msra.mxu0 0.0
    %1102 = vmatprep.subr.mxu0 0.0
    %1103 = vmatpush1.msra.mxu0 0.0
    %1104 = vmatprep.subr.mxu0 0.0
    %1105 = vmatpush1.msra.mxu0 0.0
    %1106 = vmatprep.mubr.f32.mxu0 0.0
    %1107 = vmatmul.mubr.f32.gmra.mrb[0].mxu0 %v1040
    %v1108 = vpop.f32.mrb[0].mxu0
    %v1109 = vadd.f32 0.0, %v1108
    %v1110 = vpop.f32.mrb[0].mxu0
    %1111 = vdwg.mxu0
    %1112 = vrot.lane.b32.xlu0 %v178, 64
    %v1113 = vpop.permute.xlu0 %1112
    %v1116 = vsel %vm189, %v879, 0
    %1118 = vmatprep.subr.mxu0 0.0
    %1119 = vmatpush1.msra.mxu0 %v1113
    %1120 = vmatprep.subr.mxu0 0.0
    %1121 = vmatpush1.msra.mxu0 0.0
    %1122 = vmatprep.subr.mxu0 0.0
    %1123 = vmatpush1.msra.mxu0 0.0
    %1124 = vmatprep.subr.mxu0 0.0
    %1125 = vmatpush1.msra.mxu0 0.0
    %1126 = vmatprep.subr.mxu0 0.0
    %1127 = vmatpush1.msra.mxu0 0.0
    %1128 = vmatprep.subr.mxu0 0.0
    %1129 = vmatpush1.msra.mxu0 0.0
    %1130 = vmatprep.subr.mxu0 0.0
    %1131 = vmatpush1.msra.mxu0 0.0
    %1132 = vmatprep.subr.mxu0 0.0
    %1133 = vmatpush1.msra.mxu0 0.0
    %1134 = vmatprep.subr.mxu0 0.0
    %1135 = vmatpush1.msra.mxu0 0.0
    %1136 = vmatprep.subr.mxu0 0.0
    %1137 = vmatpush1.msra.mxu0 0.0
    %1138 = vmatprep.subr.mxu0 0.0
    %1139 = vmatpush1.msra.mxu0 0.0
    %1140 = vmatprep.subr.mxu0 0.0
    %1141 = vmatpush1.msra.mxu0 0.0
    %1142 = vmatprep.subr.mxu0 0.0
    %1143 = vmatpush1.msra.mxu0 0.0
    %1144 = vmatprep.subr.mxu0 0.0
    %1145 = vmatpush1.msra.mxu0 0.0
    %1146 = vmatprep.subr.mxu0 0.0
    %1147 = vmatpush1.msra.mxu0 0.0
    %1148 = vmatprep.subr.mxu0 0.0
    %1149 = vmatpush1.msra.mxu0 0.0
    %1150 = vmatprep.subr.mxu0 0.0
    %1151 = vmatpush1.msra.mxu0 0.0
    %1152 = vmatprep.subr.mxu0 0.0
    %1153 = vmatpush1.msra.mxu0 0.0
    %1154 = vmatprep.subr.mxu0 0.0
    %1155 = vmatpush1.msra.mxu0 0.0
    %1156 = vmatprep.subr.mxu0 0.0
    %1157 = vmatpush1.msra.mxu0 0.0
    %1158 = vmatprep.subr.mxu0 0.0
    %1159 = vmatpush1.msra.mxu0 0.0
    %1160 = vmatprep.subr.mxu0 0.0
    %1161 = vmatpush1.msra.mxu0 0.0
    %1162 = vmatprep.subr.mxu0 0.0
    %1163 = vmatpush1.msra.mxu0 0.0
    %1164 = vmatprep.subr.mxu0 0.0
    %1165 = vmatpush1.msra.mxu0 0.0
    %1166 = vmatprep.subr.mxu0 0.0
    %1167 = vmatpush1.msra.mxu0 0.0
    %1168 = vmatprep.subr.mxu0 0.0
    %1169 = vmatpush1.msra.mxu0 0.0
    %1170 = vmatprep.subr.mxu0 0.0
    %1171 = vmatpush1.msra.mxu0 0.0
    %1172 = vmatprep.subr.mxu0 0.0
    %1173 = vmatpush1.msra.mxu0 0.0
    %1174 = vmatprep.subr.mxu0 0.0
    %1175 = vmatpush1.msra.mxu0 0.0
    %1176 = vmatprep.subr.mxu0 0.0
    %1177 = vmatpush1.msra.mxu0 0.0
    %1178 = vmatprep.subr.mxu0 0.0
    %1179 = vmatpush1.msra.mxu0 0.0
    %1180 = vmatprep.subr.mxu0 0.0
    %1181 = vmatpush1.msra.mxu0 0.0
    %1182 = vmatprep.mubr.f32.mxu0 0.0
    %1183 = vmatmul.mubr.f32.gmra.mrb[0].mxu0 %v1116
    %v1184 = vpop.f32.mrb[0].mxu0
    %v1185 = vadd.f32 0.0, %v1184
    %v1186 = vpop.f32.mrb[0].mxu0
    %1187 = vdwg.mxu0
    %1188 = vrot.lane.b32.xlu0 %v180, 64
    %v1189 = vpop.permute.xlu0 %1188
    %v1192 = vsel %vm189, %v880, 0
    %1194 = vmatprep.subr.mxu0 0.0
    %1195 = vmatpush1.msra.mxu0 %v1189
    %1196 = vmatprep.subr.mxu0 0.0
    %1197 = vmatpush1.msra.mxu0 0.0
    %1198 = vmatprep.subr.mxu0 0.0
    %1199 = vmatpush1.msra.mxu0 0.0
    %1200 = vmatprep.subr.mxu0 0.0
    %1201 = vmatpush1.msra.mxu0 0.0
    %1202 = vmatprep.subr.mxu0 0.0
    %1203 = vmatpush1.msra.mxu0 0.0
    %1204 = vmatprep.subr.mxu0 0.0
    %1205 = vmatpush1.msra.mxu0 0.0
    %1206 = vmatprep.subr.mxu0 0.0
    %1207 = vmatpush1.msra.mxu0 0.0
    %1208 = vmatprep.subr.mxu0 0.0
    %1209 = vmatpush1.msra.mxu0 0.0
    %1210 = vmatprep.subr.mxu0 0.0
    %1211 = vmatpush1.msra.mxu0 0.0
    %1212 = vmatprep.subr.mxu0 0.0
    %1213 = vmatpush1.msra.mxu0 0.0
    %1214 = vmatprep.subr.mxu0 0.0
    %1215 = vmatpush1.msra.mxu0 0.0
    %1216 = vmatprep.subr.mxu0 0.0
    %1217 = vmatpush1.msra.mxu0 0.0
    %1218 = vmatprep.subr.mxu0 0.0
    %1219 = vmatpush1.msra.mxu0 0.0
    %1220 = vmatprep.subr.mxu0 0.0
    %1221 = vmatpush1.msra.mxu0 0.0
    %1222 = vmatprep.subr.mxu0 0.0
    %1223 = vmatpush1.msra.mxu0 0.0
    %1224 = vmatprep.subr.mxu0 0.0
    %1225 = vmatpush1.msra.mxu0 0.0
    %1226 = vmatprep.subr.mxu0 0.0
    %1227 = vmatpush1.msra.mxu0 0.0
    %1228 = vmatprep.subr.mxu0 0.0
    %1229 = vmatpush1.msra.mxu0 0.0
    %1230 = vmatprep.subr.mxu0 0.0
    %1231 = vmatpush1.msra.mxu0 0.0
    %1232 = vmatprep.subr.mxu0 0.0
    %1233 = vmatpush1.msra.mxu0 0.0
    %1234 = vmatprep.subr.mxu0 0.0
    %1235 = vmatpush1.msra.mxu0 0.0
    %1236 = vmatprep.subr.mxu0 0.0
    %1237 = vmatpush1.msra.mxu0 0.0
    %1238 = vmatprep.subr.mxu0 0.0
    %1239 = vmatpush1.msra.mxu0 0.0
    %1240 = vmatprep.subr.mxu0 0.0
    %1241 = vmatpush1.msra.mxu0 0.0
    %1242 = vmatprep.subr.mxu0 0.0
    %1243 = vmatpush1.msra.mxu0 0.0
    %1244 = vmatprep.subr.mxu0 0.0
    %1245 = vmatpush1.msra.mxu0 0.0
    %1246 = vmatprep.subr.mxu0 0.0
    %1247 = vmatpush1.msra.mxu0 0.0
    %1248 = vmatprep.subr.mxu0 0.0
    %1249 = vmatpush1.msra.mxu0 0.0
    %1250 = vmatprep.subr.mxu0 0.0
    %1251 = vmatpush1.msra.mxu0 0.0
    %1252 = vmatprep.subr.mxu0 0.0
    %1253 = vmatpush1.msra.mxu0 0.0
    %1254 = vmatprep.subr.mxu0 0.0
    %1255 = vmatpush1.msra.mxu0 0.0
    %1256 = vmatprep.subr.mxu0 0.0
    %1257 = vmatpush1.msra.mxu0 0.0
    %1258 = vmatprep.mubr.f32.mxu0 0.0
    %1259 = vmatmul.mubr.f32.gmra.mrb[0].mxu0 %v1192
    %v1260 = vpop.f32.mrb[0].mxu0
    %v1261 = vadd.f32 0.0, %v1260
    %v1262 = vpop.f32.mrb[0].mxu0
    %1263 = vdwg.mxu0
    %1264 = vrot.lane.b32.xlu0 %v182, 64
    %v1265 = vpop.permute.xlu0 %1264
    %v1268 = vsel %vm189, %v881, 0
    %1270 = vmatprep.subr.mxu0 0.0
    %1271 = vmatpush1.msra.mxu0 %v1265
    %1272 = vmatprep.subr.mxu0 0.0
    %1273 = vmatpush1.msra.mxu0 0.0
    %1274 = vmatprep.subr.mxu0 0.0
    %1275 = vmatpush1.msra.mxu0 0.0
    %1276 = vmatprep.subr.mxu0 0.0
    %1277 = vmatpush1.msra.mxu0 0.0
    %1278 = vmatprep.subr.mxu0 0.0
    %1279 = vmatpush1.msra.mxu0 0.0
    %1280 = vmatprep.subr.mxu0 0.0
    %1281 = vmatpush1.msra.mxu0 0.0
    %1282 = vmatprep.subr.mxu0 0.0
    %1283 = vmatpush1.msra.mxu0 0.0
    %1284 = vmatprep.subr.mxu0 0.0
    %1285 = vmatpush1.msra.mxu0 0.0
    %1286 = vmatprep.subr.mxu0 0.0
    %1287 = vmatpush1.msra.mxu0 0.0
    %1288 = vmatprep.subr.mxu0 0.0
    %1289 = vmatpush1.msra.mxu0 0.0
    %1290 = vmatprep.subr.mxu0 0.0
    %1291 = vmatpush1.msra.mxu0 0.0
    %1292 = vmatprep.subr.mxu0 0.0
    %1293 = vmatpush1.msra.mxu0 0.0
    %1294 = vmatprep.subr.mxu0 0.0
    %1295 = vmatpush1.msra.mxu0 0.0
    %1296 = vmatprep.subr.mxu0 0.0
    %1297 = vmatpush1.msra.mxu0 0.0
    %1298 = vmatprep.subr.mxu0 0.0
    %1299 = vmatpush1.msra.mxu0 0.0
    %1300 = vmatprep.subr.mxu0 0.0
    %1301 = vmatpush1.msra.mxu0 0.0
    %1302 = vmatprep.subr.mxu0 0.0
    %1303 = vmatpush1.msra.mxu0 0.0
    %1304 = vmatprep.subr.mxu0 0.0
    %1305 = vmatpush1.msra.mxu0 0.0
    %1306 = vmatprep.subr.mxu0 0.0
    %1307 = vmatpush1.msra.mxu0 0.0
    %1308 = vmatprep.subr.mxu0 0.0
    %1309 = vmatpush1.msra.mxu0 0.0
    %1310 = vmatprep.subr.mxu0 0.0
    %1311 = vmatpush1.msra.mxu0 0.0
    %1312 = vmatprep.subr.mxu0 0.0
    %1313 = vmatpush1.msra.mxu0 0.0
    %1314 = vmatprep.subr.mxu0 0.0
    %1315 = vmatpush1.msra.mxu0 0.0
    %1316 = vmatprep.subr.mxu0 0.0
    %1317 = vmatpush1.msra.mxu0 0.0
    %1318 = vmatprep.subr.mxu0 0.0
    %1319 = vmatpush1.msra.mxu0 0.0
    %1320 = vmatprep.subr.mxu0 0.0
    %1321 = vmatpush1.msra.mxu0 0.0
    %1322 = vmatprep.subr.mxu0 0.0
    %1323 = vmatpush1.msra.mxu0 0.0
    %1324 = vmatprep.subr.mxu0 0.0
    %1325 = vmatpush1.msra.mxu0 0.0
    %1326 = vmatprep.subr.mxu0 0.0
    %1327 = vmatpush1.msra.mxu0 0.0
    %1328 = vmatprep.subr.mxu0 0.0
    %1329 = vmatpush1.msra.mxu0 0.0
    %1330 = vmatprep.subr.mxu0 0.0
    %1331 = vmatpush1.msra.mxu0 0.0
    %1332 = vmatprep.subr.mxu0 0.0
    %1333 = vmatpush1.msra.mxu0 0.0
    %1334 = vmatprep.mubr.f32.mxu0 0.0
    %1335 = vmatmul.mubr.f32.gmra.mrb[0].mxu0 %v1268
    %v1336 = vpop.f32.mrb[0].mxu0
    %v1337 = vadd.f32 0.0, %v1336
    %v1338 = vpop.f32.mrb[0].mxu0
    %1339 = vdwg.mxu0
    %1340 = vrot.lane.b32.xlu0 %v184, 64
    %v1341 = vpop.permute.xlu0 %1340
    %v1344 = vsel %vm189, %v882, 0
    %1346 = vmatprep.subr.mxu0 0.0
    %1347 = vmatpush1.msra.mxu0 %v1341
    %1348 = vmatprep.subr.mxu0 0.0
    %1349 = vmatpush1.msra.mxu0 0.0
    %1350 = vmatprep.subr.mxu0 0.0
    %1351 = vmatpush1.msra.mxu0 0.0
    %1352 = vmatprep.subr.mxu0 0.0
    %1353 = vmatpush1.msra.mxu0 0.0
    %1354 = vmatprep.subr.mxu0 0.0
    %1355 = vmatpush1.msra.mxu0 0.0
    %1356 = vmatprep.subr.mxu0 0.0
    %1357 = vmatpush1.msra.mxu0 0.0
    %1358 = vmatprep.subr.mxu0 0.0
    %1359 = vmatpush1.msra.mxu0 0.0
    %1360 = vmatprep.subr.mxu0 0.0
    %1361 = vmatpush1.msra.mxu0 0.0
    %1362 = vmatprep.subr.mxu0 0.0
    %1363 = vmatpush1.msra.mxu0 0.0
    %1364 = vmatprep.subr.mxu0 0.0
    %1365 = vmatpush1.msra.mxu0 0.0
    %1366 = vmatprep.subr.mxu0 0.0
    %1367 = vmatpush1.msra.mxu0 0.0
    %1368 = vmatprep.subr.mxu0 0.0
    %1369 = vmatpush1.msra.mxu0 0.0
    %1370 = vmatprep.subr.mxu0 0.0
    %1371 = vmatpush1.msra.mxu0 0.0
    %1372 = vmatprep.subr.mxu0 0.0
    %1373 = vmatpush1.msra.mxu0 0.0
    %1374 = vmatprep.subr.mxu0 0.0
    %1375 = vmatpush1.msra.mxu0 0.0
    %1376 = vmatprep.subr.mxu0 0.0
    %1377 = vmatpush1.msra.mxu0 0.0
    %1378 = vmatprep.subr.mxu0 0.0
    %1379 = vmatpush1.msra.mxu0 0.0
    %1380 = vmatprep.subr.mxu0 0.0
    %1381 = vmatpush1.msra.mxu0 0.0
    %1382 = vmatprep.subr.mxu0 0.0
    %1383 = vmatpush1.msra.mxu0 0.0
    %1384 = vmatprep.subr.mxu0 0.0
    %1385 = vmatpush1.msra.mxu0 0.0
    %1386 = vmatprep.subr.mxu0 0.0
    %1387 = vmatpush1.msra.mxu0 0.0
    %1388 = vmatprep.subr.mxu0 0.0
    %1389 = vmatpush1.msra.mxu0 0.0
    %1390 = vmatprep.subr.mxu0 0.0
    %1391 = vmatpush1.msra.mxu0 0.0
    %1392 = vmatprep.subr.mxu0 0.0
    %1393 = vmatpush1.msra.mxu0 0.0
    %1394 = vmatprep.subr.mxu0 0.0
    %1395 = vmatpush1.msra.mxu0 0.0
    %1396 = vmatprep.subr.mxu0 0.0
    %1397 = vmatpush1.msra.mxu0 0.0
    %1398 = vmatprep.subr.mxu0 0.0
    %1399 = vmatpush1.msra.mxu0 0.0
    %1400 = vmatprep.subr.mxu0 0.0
    %1401 = vmatpush1.msra.mxu0 0.0
    %1402 = vmatprep.subr.mxu0 0.0
    %1403 = vmatpush1.msra.mxu0 0.0
    %1404 = vmatprep.subr.mxu0 0.0
    %1405 = vmatpush1.msra.mxu0 0.0
    %1406 = vmatprep.subr.mxu0 0.0
    %1407 = vmatpush1.msra.mxu0 0.0
    %1408 = vmatprep.subr.mxu0 0.0
    %1409 = vmatpush1.msra.mxu0 0.0
    %1410 = vmatprep.mubr.f32.mxu0 0.0
    %1411 = vmatmul.mubr.f32.gmra.mrb[0].mxu0 %v1344
    %v1412 = vpop.f32.mrb[0].mxu0
    %v1413 = vadd.f32 0.0, %v1412
    %v1414 = vpop.f32.mrb[0].mxu0
    %1415 = vdwg.mxu0
    %1416 = vrot.lane.b32.xlu0 %v186, 64
    %v1417 = vpop.permute.xlu0 %1416
    %v1420 = vsel %vm189, %v883, 0
    %1422 = vmatprep.subr.mxu0 0.0
    %1423 = vmatpush1.msra.mxu0 %v1417
    %1424 = vmatprep.subr.mxu0 0.0
    %1425 = vmatpush1.msra.mxu0 0.0
    %1426 = vmatprep.subr.mxu0 0.0
    %1427 = vmatpush1.msra.mxu0 0.0
    %1428 = vmatprep.subr.mxu0 0.0
    %1429 = vmatpush1.msra.mxu0 0.0
    %1430 = vmatprep.subr.mxu0 0.0
    %1431 = vmatpush1.msra.mxu0 0.0
    %1432 = vmatprep.subr.mxu0 0.0
    %1433 = vmatpush1.msra.mxu0 0.0
    %1434 = vmatprep.subr.mxu0 0.0
    %1435 = vmatpush1.msra.mxu0 0.0
    %1436 = vmatprep.subr.mxu0 0.0
    %1437 = vmatpush1.msra.mxu0 0.0
    %1438 = vmatprep.subr.mxu0 0.0
    %1439 = vmatpush1.msra.mxu0 0.0
    %1440 = vmatprep.subr.mxu0 0.0
    %1441 = vmatpush1.msra.mxu0 0.0
    %1442 = vmatprep.subr.mxu0 0.0
    %1443 = vmatpush1.msra.mxu0 0.0
    %1444 = vmatprep.subr.mxu0 0.0
    %1445 = vmatpush1.msra.mxu0 0.0
    %1446 = vmatprep.subr.mxu0 0.0
    %1447 = vmatpush1.msra.mxu0 0.0
    %1448 = vmatprep.subr.mxu0 0.0
    %1449 = vmatpush1.msra.mxu0 0.0
    %1450 = vmatprep.subr.mxu0 0.0
    %1451 = vmatpush1.msra.mxu0 0.0
    %1452 = vmatprep.subr.mxu0 0.0
    %1453 = vmatpush1.msra.mxu0 0.0
    %1454 = vmatprep.subr.mxu0 0.0
    %1455 = vmatpush1.msra.mxu0 0.0
    %1456 = vmatprep.subr.mxu0 0.0
    %1457 = vmatpush1.msra.mxu0 0.0
    %1458 = vmatprep.subr.mxu0 0.0
    %1459 = vmatpush1.msra.mxu0 0.0
    %1460 = vmatprep.subr.mxu0 0.0
    %1461 = vmatpush1.msra.mxu0 0.0
    %1462 = vmatprep.subr.mxu0 0.0
    %1463 = vmatpush1.msra.mxu0 0.0
    %1464 = vmatprep.subr.mxu0 0.0
    %1465 = vmatpush1.msra.mxu0 0.0
    %1466 = vmatprep.subr.mxu0 0.0
    %1467 = vmatpush1.msra.mxu0 0.0
    %1468 = vmatprep.subr.mxu0 0.0
    %1469 = vmatpush1.msra.mxu0 0.0
    %1470 = vmatprep.subr.mxu0 0.0
    %1471 = vmatpush1.msra.mxu0 0.0
    %1472 = vmatprep.subr.mxu0 0.0
    %1473 = vmatpush1.msra.mxu0 0.0
    %1474 = vmatprep.subr.mxu0 0.0
    %1475 = vmatpush1.msra.mxu0 0.0
    %1476 = vmatprep.subr.mxu0 0.0
    %1477 = vmatpush1.msra.mxu0 0.0
    %1478 = vmatprep.subr.mxu0 0.0
    %1479 = vmatpush1.msra.mxu0 0.0
    %1480 = vmatprep.subr.mxu0 0.0
    %1481 = vmatpush1.msra.mxu0 0.0
    %1482 = vmatprep.subr.mxu0 0.0
    %1483 = vmatpush1.msra.mxu0 0.0
    %1484 = vmatprep.subr.mxu0 0.0
    %1485 = vmatpush1.msra.mxu0 0.0
    %1486 = vmatprep.mubr.f32.mxu0 0.0
    %1487 = vmatmul.mubr.f32.gmra.mrb[0].mxu0 %v1420
    %v1488 = vpop.f32.mrb[0].mxu0
    %v1489 = vadd.f32 0.0, %v1488
    %v1490 = vpop.f32.mrb[0].mxu0
    %1491 = vdwg.mxu0
    %1494 = vrot.lane.b32.xlu0 %v1109, 8
    %v1495 = vpop.permute.xlu0 %1494
    %1496 = vrot.lane.b32.xlu0 %v1185, 8
    %v1497 = vpop.permute.xlu0 %1496
    %1502 = vrot.lane.b32.xlu0 %v1261, 16
    %v1503 = vpop.permute.xlu0 %1502
    %1504 = vrot.lane.b32.xlu0 %v1337, 16
    %v1505 = vpop.permute.xlu0 %1504
    %1510 = vrot.lane.b32.xlu0 %v1413, 24
    %v1511 = vpop.permute.xlu0 %1510
    %1512 = vrot.lane.b32.xlu0 %v1489, 24
    %v1513 = vpop.permute.xlu0 %1512
    %v1516 = vsel %vm189, %v957, %v1495
    %v1517 = vsel %vm189, %v1033, %v1497
    %vm1518 = vcmask 130048
    %v1519 = vsel %vm1518, %v1516, %v1503
    %v1520 = vsel %vm1518, %v1517, %v1505
    %vm1521 = vcmask 195584
    %v1522 = vsel %vm1521, %v1519, %v1511
    %v1523 = vsel %vm1521, %v1520, %v1513
    %v1524 = vld [vmem:[%s3] sm:$0xff]
    %v1525 = vld [vmem:[%s3 + $0x8] sm:$0xff]
    %v1526 = vld [vmem:[%s3 + $0x10] sm:$0xff]
    %v1527 = vld [vmem:[%s3 + $0x18] sm:$0xff]
    %v1528 = vlaneseq
    %v1529 = vshrl.u32 %v1528, 7
    %v1530 = vsub.s32 4, %v1529
    %v1531 = vrot.slane %v24, %v1530
    %v1533 = vsel %vm30, %v1522, 0
    %v1536 = vsel %vm30, %v1523, 0
    %1538 = vmatprep.subr.mxu0 0.0
    %1539 = vmatpush1.msra.mxu0 %v1524
    %1540 = vmatprep.subr.mxu0 0.0
    %1541 = vmatpush1.msra.mxu0 %v1525
    %1542 = vmatprep.subr.mxu0 0.0
    %1543 = vmatpush1.msra.mxu0 %v1526
    %1544 = vmatprep.subr.mxu0 0.0
    %1545 = vmatpush1.msra.mxu0 %v1527
    %1546 = vmatprep.subr.mxu0 0.0
    %1547 = vmatpush1.msra.mxu0 0.0
    %1548 = vmatprep.subr.mxu0 0.0
    %1549 = vmatpush1.msra.mxu0 0.0
    %1550 = vmatprep.subr.mxu0 0.0
    %1551 = vmatpush1.msra.mxu0 0.0
    %1552 = vmatprep.subr.mxu0 0.0
    %1553 = vmatpush1.msra.mxu0 0.0
    %1554 = vmatprep.subr.mxu0 0.0
    %1555 = vmatpush1.msra.mxu0 0.0
    %1556 = vmatprep.subr.mxu0 0.0
    %1557 = vmatpush1.msra.mxu0 0.0
    %1558 = vmatprep.subr.mxu0 0.0
    %1559 = vmatpush1.msra.mxu0 0.0
    %1560 = vmatprep.subr.mxu0 0.0
    %1561 = vmatpush1.msra.mxu0 0.0
    %1562 = vmatprep.subr.mxu0 0.0
    %1563 = vmatpush1.msra.mxu0 0.0
    %1564 = vmatprep.subr.mxu0 0.0
    %1565 = vmatpush1.msra.mxu0 0.0
    %1566 = vmatprep.subr.mxu0 0.0
    %1567 = vmatpush1.msra.mxu0 0.0
    %1568 = vmatprep.subr.mxu0 0.0
    %1569 = vmatpush1.msra.mxu0 0.0
    %1570 = vmatprep.subr.mxu0 0.0
    %1571 = vmatpush1.msra.mxu0 0.0
    %1572 = vmatprep.subr.mxu0 0.0
    %1573 = vmatpush1.msra.mxu0 0.0
    %1574 = vmatprep.subr.mxu0 0.0
    %1575 = vmatpush1.msra.mxu0 0.0
    %1576 = vmatprep.subr.mxu0 0.0
    %1577 = vmatpush1.msra.mxu0 0.0
    %1578 = vmatprep.subr.mxu0 0.0
    %1579 = vmatpush1.msra.mxu0 0.0
    %1580 = vmatprep.subr.mxu0 0.0
    %1581 = vmatpush1.msra.mxu0 0.0
    %1582 = vmatprep.subr.mxu0 0.0
    %1583 = vmatpush1.msra.mxu0 0.0
    %1584 = vmatprep.subr.mxu0 0.0
    %1585 = vmatpush1.msra.mxu0 0.0
    %1586 = vmatprep.subr.mxu0 0.0
    %1587 = vmatpush1.msra.mxu0 0.0
    %1588 = vmatprep.subr.mxu0 0.0
    %1589 = vmatpush1.msra.mxu0 0.0
    %1590 = vmatprep.subr.mxu0 0.0
    %1591 = vmatpush1.msra.mxu0 0.0
    %1592 = vmatprep.subr.mxu0 0.0
    %1593 = vmatpush1.msra.mxu0 0.0
    %1594 = vmatprep.subr.mxu0 0.0
    %1595 = vmatpush1.msra.mxu0 0.0
    %1596 = vmatprep.subr.mxu0 0.0
    %1597 = vmatpush1.msra.mxu0 0.0
    %1598 = vmatprep.subr.mxu0 0.0
    %1599 = vmatpush1.msra.mxu0 0.0
    %1600 = vmatprep.subr.mxu0 0.0
    %1601 = vmatpush1.msra.mxu0 0.0
    %1602 = vmatprep.mubr.f32.mxu0 0.0
    %1603 = vmatmul.mubr.f32.gmra.mrb[0].mxu0 %v1533
    %v1604 = vpop.f32.mrb[0].mxu0
    %v1605 = vadd.f32 %v1531, %v1604
    %v1606 = vpop.f32.mrb[0].mxu0
    %1607 = vmatprep.mubr.f32.mxu0 0.0
    %1608 = vmatmul.mubr.f32.gmra.mrb[0].mxu0 %v1536
    %v1609 = vpop.f32.mrb[0].mxu0
    %v1610 = vadd.f32 %v1531, %v1609
    %v1611 = vpop.f32.mrb[0].mxu0
    %1612 = vdwg.mxu0
    %v1613 = vadd.f32 %v28, %v1605
    %v1614 = vadd.f32 %v29, %v1610
    %v1615 = vsel %vm30, %v1613, 0.0
    %1616 = vadd.xlane.f32.xlu0 %v1615
    %v1617 = vpop.xlane.xlu0 %1616
    %v1618 = vsel %vm30, %v1614, 0.0
    %1619 = vadd.xlane.f32.xlu0 %v1618
    %v1620 = vpop.xlane.xlu0 %1619
    %v1621 = vmul.f32 %v1617, %v37
    %v1622 = vmul.f32 %v1620, %v37
    %v1623 = vsub.f32 %v1613, %v1621
    %v1624 = vsub.f32 %v1614, %v1622
    %v1625 = vmul.f32 %v1623, %v1623
    %v1626 = vmul.f32 %v1624, %v1624
    %v1627 = vsel %vm30, %v1625, 0.0
    %1628 = vadd.xlane.f32.xlu0 %v1627
    %v1629 = vpop.xlane.xlu0 %1628
    %v1630 = vsel %vm30, %v1626, 0.0
    %1631 = vadd.xlane.f32.xlu0 %v1630
    %v1632 = vpop.xlane.xlu0 %1631
    %v1633 = vmul.f32 %v1629, %v37
    %v1634 = vmul.f32 %v1632, %v37
    %v1635 = vadd.f32 %v1633, 1e-12
    %v1636 = vadd.f32 %v1634, 1e-12
    %v1637 = vrsqrt.pop %v1635
    %v1638 = vmul.f32 %v1635, %v1637
    %vm1639 = vcmp.eq.f32.partialorder %v1635, inf
    %v1640 = vsel %vm1639, %v1635, %v1638
    %vm1641 = vcmp.eq.f32.partialorder %v1635, 0.0
    %v1642 = vand.u32 %v1635, 2147483648
    %v1643 = vsel %vm1641, %v1642, %v1640
    %v1644 = vrsqrt.pop %v1636
    %v1645 = vmul.f32 %v1636, %v1644
    %vm1646 = vcmp.eq.f32.partialorder %v1636, inf
    %v1647 = vsel %vm1646, %v1636, %v1645
    %vm1648 = vcmp.eq.f32.partialorder %v1636, 0.0
    %v1649 = vand.u32 %v1636, 2147483648
    %v1650 = vsel %vm1648, %v1649, %v1647
    %v1651 = vrcp.pop %v1643
    %v1652 = vmul.f32 %v1623, %v1651
    %v1653 = vrcp.pop %v1650
    %v1654 = vmul.f32 %v1624, %v1653
    %v1655 = vlaneseq
    %v1656 = vshrl.u32 %v1655, 7
    %v1657 = vsub.s32 2, %v1656
    %v1658 = vrot.slane %v24, %v1657
    %v1659 = vmul.f32 %v1658, %v1652
    %v1660 = vmul.f32 %v1658, %v1654
    %v1661 = vlaneseq
    %v1662 = vshrl.u32 %v1661, 7
    %v1663 = vsub.s32 3, %v1662
    %v1664 = vrot.slane %v24, %v1663
    %v1665 = vadd.f32 %v1659, %v1664
    %v1666 = vadd.f32 %v1660, %v1664
    %v1667 = vld [vmem:[%s4] sm:$0xff]
    %v1668 = vld [vmem:[%s4 + $0x8] sm:$0xff]
    %v1669 = vld [vmem:[%s4 + $0x10] sm:$0xff]
    %v1670 = vld [vmem:[%s4 + $0x18] sm:$0xff]
    %v1671 = vlaneseq
    %v1672 = vshrl.u32 %v1671, 7
    %v1673 = vsub.s32 7, %v1672
    %v1674 = vrot.slane %v24, %v1673
    %v1676 = vsel %vm30, %v1665, 0
    %v1679 = vsel %vm30, %v1666, 0
    %1681 = vmatprep.subr.mxu0 0.0
    %1682 = vmatpush1.msra.mxu0 %v1667
    %1683 = vmatprep.subr.mxu0 0.0
    %1684 = vmatpush1.msra.mxu0 %v1668
    %1685 = vmatprep.subr.mxu0 0.0
    %1686 = vmatpush1.msra.mxu0 %v1669
    %1687 = vmatprep.subr.mxu0 0.0
    %1688 = vmatpush1.msra.mxu0 %v1670
    %1689 = vmatprep.subr.mxu0 0.0
    %1690 = vmatpush1.msra.mxu0 0.0
    %1691 = vmatprep.subr.mxu0 0.0
    %1692 = vmatpush1.msra.mxu0 0.0
    %1693 = vmatprep.subr.mxu0 0.0
    %1694 = vmatpush1.msra.mxu0 0.0
    %1695 = vmatprep.subr.mxu0 0.0
    %1696 = vmatpush1.msra.mxu0 0.0
    %1697 = vmatprep.subr.mxu0 0.0
    %1698 = vmatpush1.msra.mxu0 0.0
    %1699 = vmatprep.subr.mxu0 0.0
    %1700 = vmatpush1.msra.mxu0 0.0
    %1701 = vmatprep.subr.mxu0 0.0
    %1702 = vmatpush1.msra.mxu0 0.0
    %1703 = vmatprep.subr.mxu0 0.0
    %1704 = vmatpush1.msra.mxu0 0.0
    %1705 = vmatprep.subr.mxu0 0.0
    %1706 = vmatpush1.msra.mxu0 0.0
    %1707 = vmatprep.subr.mxu0 0.0
    %1708 = vmatpush1.msra.mxu0 0.0
    %1709 = vmatprep.subr.mxu0 0.0
    %1710 = vmatpush1.msra.mxu0 0.0
    %1711 = vmatprep.subr.mxu0 0.0
    %1712 = vmatpush1.msra.mxu0 0.0
    %1713 = vmatprep.subr.mxu0 0.0
    %1714 = vmatpush1.msra.mxu0 0.0
    %1715 = vmatprep.subr.mxu0 0.0
    %1716 = vmatpush1.msra.mxu0 0.0
    %1717 = vmatprep.subr.mxu0 0.0
    %1718 = vmatpush1.msra.mxu0 0.0
    %1719 = vmatprep.subr.mxu0 0.0
    %1720 = vmatpush1.msra.mxu0 0.0
    %1721 = vmatprep.subr.mxu0 0.0
    %1722 = vmatpush1.msra.mxu0 0.0
    %1723 = vmatprep.subr.mxu0 0.0
    %1724 = vmatpush1.msra.mxu0 0.0
    %1725 = vmatprep.subr.mxu0 0.0
    %1726 = vmatpush1.msra.mxu0 0.0
    %1727 = vmatprep.subr.mxu0 0.0
    %1728 = vmatpush1.msra.mxu0 0.0
    %1729 = vmatprep.subr.mxu0 0.0
    %1730 = vmatpush1.msra.mxu0 0.0
    %1731 = vmatprep.subr.mxu0 0.0
    %1732 = vmatpush1.msra.mxu0 0.0
    %1733 = vmatprep.subr.mxu0 0.0
    %1734 = vmatpush1.msra.mxu0 0.0
    %1735 = vmatprep.subr.mxu0 0.0
    %1736 = vmatpush1.msra.mxu0 0.0
    %1737 = vmatprep.subr.mxu0 0.0
    %1738 = vmatpush1.msra.mxu0 0.0
    %1739 = vmatprep.subr.mxu0 0.0
    %1740 = vmatpush1.msra.mxu0 0.0
    %1741 = vmatprep.subr.mxu0 0.0
    %1742 = vmatpush1.msra.mxu0 0.0
    %1743 = vmatprep.subr.mxu0 0.0
    %1744 = vmatpush1.msra.mxu0 0.0
    %1745 = vmatprep.mubr.f32.mxu0 0.0
    %1746 = vmatmul.mubr.f32.gmra.mrb[0].mxu0 %v1676
    %v1747 = vpop.f32.mrb[0].mxu0
    %v1748 = vadd.f32 %v1674, %v1747
    %v1749 = vpop.f32.mrb[0].mxu0
    %1750 = vmatprep.mubr.f32.mxu0 0.0
    %1751 = vmatmul.mubr.f32.gmra.mrb[0].mxu0 %v1679
    %v1752 = vpop.f32.mrb[0].mxu0
    %v1753 = vadd.f32 %v1674, %v1752
    %v1754 = vpop.f32.mrb[0].mxu0
    %1755 = vdwg.mxu0
    %v1756 = vmul.f32 %v1748, 1.702
    %v1757 = vmul.f32 %v1753, 1.702
    %v1758 = vxor.u32 %v1756, 2147483648
    %v1759 = vxor.u32 %v1757, 2147483648
    %v1760 = vmul.f32 %v1758, 1.442695
    %v1761 = vpow.pop %v1760
    %v1762 = vmul.f32 %v1759, 1.442695
    %v1763 = vpow.pop %v1762
    %v1764 = vadd.f32 %v1761, 1.0
    %v1765 = vadd.f32 %v1763, 1.0
    %v1766 = vrcp.pop %v1764
    %v1767 = vmul.f32 1.0, %v1766
    %v1768 = vrcp.pop %v1765
    %v1769 = vmul.f32 1.0, %v1768
    %v1770 = vmul.f32 %v1748, %v1767
    %v1771 = vmul.f32 %v1753, %v1769
    %v1772 = vrot.slane %v1615, 4
    %v1773 = vadd.f32 %v1615, %v1772
    %v1774 = vrot.slane %v1773, 2
    %v1775 = vadd.f32 %v1773, %v1774
    %v1776 = vrot.slane %v1775, 1
    %v1777 = vadd.f32 %v1775, %v1776
    %v1778 = vrot.slane %v1618, 4
    %v1779 = vadd.f32 %v1618, %v1778
    %v1780 = vrot.slane %v1779, 2
    %v1781 = vadd.f32 %v1779, %v1780
    %v1782 = vrot.slane %v1781, 1
    %v1783 = vadd.f32 %v1781, %v1782
    %v1784 = vmul.f32 %v1777, 0.125
    %v1785 = vmul.f32 %v1783, 0.125
    %v1786 = vrot.slane %v1770, 4
    %v1787 = vadd.f32 %v1770, %v1786
    %v1788 = vrot.slane %v1787, 2
    %v1789 = vadd.f32 %v1787, %v1788
    %v1790 = vrot.slane %v1789, 1
    %v1791 = vadd.f32 %v1789, %v1790
    %v1792 = vrot.slane %v1771, 4
    %v1793 = vadd.f32 %v1771, %v1792
    %v1794 = vrot.slane %v1793, 2
    %v1795 = vadd.f32 %v1793, %v1794
    %v1796 = vrot.slane %v1795, 1
    %v1797 = vadd.f32 %v1795, %v1796
    %v1798 = vmul.f32 %v1791, 0.125
    %v1799 = vmul.f32 %v1797, 0.125
    %v1800 = vld [vmem:[%s5] sm:$0xff]
    %v1801 = vld [vmem:[%s5 + $0x8] sm:$0xff]
    %v1802 = vld [vmem:[%s5 + $0x10] sm:$0xff]
    %v1803 = vld [vmem:[%s5 + $0x18] sm:$0xff]
    %v1804 = vld [vmem:[%s5 + $0x20] sm:$0xff]
    %v1805 = vld [vmem:[%s5 + $0x28] sm:$0xff]
    %v1806 = vld [vmem:[%s5 + $0x30] sm:$0xff]
    %v1807 = vld [vmem:[%s5 + $0x38] sm:$0xff]
    %v1808 = vld [vmem:[%s5 + $0x40] sm:$0xff]
    %v1809 = vld [vmem:[%s5 + $0x48] sm:$0xff]
    %v1810 = vld [vmem:[%s5 + $0x50] sm:$0xff]
    %v1811 = vld [vmem:[%s5 + $0x58] sm:$0xff]
    %v1812 = vld [vmem:[%s5 + $0x60] sm:$0xff]
    %v1813 = vld [vmem:[%s5 + $0x68] sm:$0xff]
    %v1814 = vld [vmem:[%s5 + $0x70] sm:$0xff]
    %v1815 = vld [vmem:[%s5 + $0x78] sm:$0xff]
    %vm1818 = vcmask 1041409
    %v1819 = vsel %vm1818, %v1799, %v1798
    %1821 = vmatprep.subr.mxu0 0.0
    %1822 = vmatpush1.msra.mxu0 %v1800
    %1823 = vmatprep.subr.mxu0 0.0
    %1824 = vmatpush1.msra.mxu0 %v1801
    %1825 = vmatprep.subr.mxu0 0.0
    %1826 = vmatpush1.msra.mxu0 %v1802
    %1827 = vmatprep.subr.mxu0 0.0
    %1828 = vmatpush1.msra.mxu0 %v1803
    %1829 = vmatprep.subr.mxu0 0.0
    %1830 = vmatpush1.msra.mxu0 %v1804
    %1831 = vmatprep.subr.mxu0 0.0
    %1832 = vmatpush1.msra.mxu0 %v1805
    %1833 = vmatprep.subr.mxu0 0.0
    %1834 = vmatpush1.msra.mxu0 %v1806
    %1835 = vmatprep.subr.mxu0 0.0
    %1836 = vmatpush1.msra.mxu0 %v1807
    %1837 = vmatprep.subr.mxu0 0.0
    %1838 = vmatpush1.msra.mxu0 %v1808
    %1839 = vmatprep.subr.mxu0 0.0
    %1840 = vmatpush1.msra.mxu0 %v1809
    %1841 = vmatprep.subr.mxu0 0.0
    %1842 = vmatpush1.msra.mxu0 %v1810
    %1843 = vmatprep.subr.mxu0 0.0
    %1844 = vmatpush1.msra.mxu0 %v1811
    %1845 = vmatprep.subr.mxu0 0.0
    %1846 = vmatpush1.msra.mxu0 %v1812
    %1847 = vmatprep.subr.mxu0 0.0
    %1848 = vmatpush1.msra.mxu0 %v1813
    %1849 = vmatprep.subr.mxu0 0.0
    %1850 = vmatpush1.msra.mxu0 %v1814
    %1851 = vmatprep.subr.mxu0 0.0
    %1852 = vmatpush1.msra.mxu0 %v1815
    %1853 = vmatprep.subr.mxu0 0.0
    %1854 = vmatpush1.msra.mxu0 0.0
    %1855 = vmatprep.subr.mxu0 0.0
    %1856 = vmatpush1.msra.mxu0 0.0
    %1857 = vmatprep.subr.mxu0 0.0
    %1858 = vmatpush1.msra.mxu0 0.0
    %1859 = vmatprep.subr.mxu0 0.0
    %1860 = vmatpush1.msra.mxu0 0.0
    %1861 = vmatprep.subr.mxu0 0.0
    %1862 = vmatpush1.msra.mxu0 0.0
    %1863 = vmatprep.subr.mxu0 0.0
    %1864 = vmatpush1.msra.mxu0 0.0
    %1865 = vmatprep.subr.mxu0 0.0
    %1866 = vmatpush1.msra.mxu0 0.0
    %1867 = vmatprep.subr.mxu0 0.0
    %1868 = vmatpush1.msra.mxu0 0.0
    %1869 = vmatprep.subr.mxu0 0.0
    %1870 = vmatpush1.msra.mxu0 0.0
    %1871 = vmatprep.subr.mxu0 0.0
    %1872 = vmatpush1.msra.mxu0 0.0
    %1873 = vmatprep.subr.mxu0 0.0
    %1874 = vmatpush1.msra.mxu0 0.0
    %1875 = vmatprep.subr.mxu0 0.0
    %1876 = vmatpush1.msra.mxu0 0.0
    %1877 = vmatprep.subr.mxu0 0.0
    %1878 = vmatpush1.msra.mxu0 0.0
    %1879 = vmatprep.subr.mxu0 0.0
    %1880 = vmatpush1.msra.mxu0 0.0
    %1881 = vmatprep.subr.mxu0 0.0
    %1882 = vmatpush1.msra.mxu0 0.0
    %1883 = vmatprep.subr.mxu0 0.0
    %1884 = vmatpush1.msra.mxu0 0.0
    %1885 = vmatprep.mubr.f32.mxu0 0.0
    %1886 = vmatmul.mubr.f32.gmra.mrb[0].mxu0 %v1819
    %v1887 = vpop.f32.mrb[0].mxu0
    %v1888 = vadd.f32 0.0, %v1887
    %v1889 = vpop.f32.mrb[0].mxu0
    %1890 = vdwg.mxu0
    %v1892 = vrot.slane %v1888, 1
    %v1895 = vadd.f32 %v1784, %v1888
    %v1896 = vadd.f32 %v1785, %v1892
    %v1897 = vlaneseq
    %v1898 = vshrl.u32 %v1897, 7
    %v1899 = vsub.s32 5, %v1898
    %v1900 = vrot.slane %v24, %v1899
    %v1901 = vadd.f32 %v1895, %v1900
    %v1902 = vadd.f32 %v1896, %v1900
    %v1905 = vrot.slane %v1902, 7
    %v1906 = vsel %vm1818, %v1905, %v1901
    %vm1908 = vcmask 254976
    %1909 = vst.msk [vmem:[#allocation2] sm:$0x3] %vm1908, %v1906
    // Predicated region
    $region26: #{tpu_custom_call.1} parent=1 // pred_check
      _
    $region27: #{tpu_custom_call.1} parent=1 // pred_check_branch
      %1911 = sbr.rel (0) target = $region29
    $region28: #{tpu_custom_call.1} parent=1 // pred_region
      %s1913 = ssub.s32 32, 32
      %1914 = vsyncadd [#allocation3], %s1913
      %s1916 = sshll.u32 [#allocation2], 4
      %s1917 = int_to_ptr.vmem [resolvable:$true] %s1916
      %1919 = dma.vmem_to_hbm [thread:$0]  %s1917, 32, %s6, [#allocation3]
    $region29: #{tpu_custom_call.1} parent=1 // pred_fallthru
      _
    // Predicated region
    $region30: #{tpu_custom_call.1} parent=1 // pred_check
      _
    $region31: #{tpu_custom_call.1} parent=1 // pred_check_branch
      %1921 = sbr.rel (0) target = $region33
    $region32: #{tpu_custom_call.1} parent=1 // pred_region
      %1922 = dma.done [#allocation3], 32
    $region33: #{tpu_custom_call.1} parent=1 // pred_fallthru
      _
    %1923 = vsyncpa [#allocation3], 1

</llo_original>
